<compile_context>
chip_gen: v5e
topology: v5e:2x2
jax: 0.10.0
libtpu: 0.0.40
codegen_flags: <defaults>
</compile_context>

<pallas_src>
import functools

import jax
import jax.numpy as jnp
from jax.experimental import pallas as pl
from jax.experimental.pallas import tpu as pltpu


def _round_up(x, m):
    return ((x + m - 1) // m) * m


def deep_kernel_kernel(x_ref, w1_ref, b1_ref, w2_ref, b2_ref, w3_ref, b3_ref, o_ref):
    x = x_ref[...]                      # (BM, D)
    D = x_ref.shape[1]

    # ---- Layer 1: (BM, D) @ (D, 128) + b1, ReLU ------------------------------
    if D <= 8:
        # Tiny K: D unrolled broadcast multiply-adds on the VPU (f32), bias
        # folded into the init. Frees the MXU for layers 2/3 and avoids bf16
        # elementwise work (v5e's VPU has no bf16 ALUs).
        w1 = w1_ref[...]                # (D, 128), f32
        z1 = x[:, 0:1] * w1[0:1, :] + b1_ref[...]
        for k in range(1, D):
            z1 = z1 + x[:, k:k + 1] * w1[k:k + 1, :]
    else:
        # Larger K: use the MXU (bf16 weights when use_bf16, f32 accumulate).
        z1 = jnp.dot(x.astype(w1_ref.dtype), w1_ref[...],
                     preferred_element_type=jnp.float32) + b1_ref[...]
    # Fuse ReLU with the cast to the layer-2 compute dtype (bf16 or f32).
    h1 = jnp.maximum(z1, 0.0).astype(w2_ref.dtype)          # (BM, 128)

    # ---- Layer 2: (BM, 128) @ (128, 256) + b2, ReLU --------------------------
    z2 = jnp.dot(h1, w2_ref[...], preferred_element_type=jnp.float32) + b2_ref[...]
    h2 = jnp.maximum(z2, 0.0).astype(w3_ref.dtype)           # (BM, 256)

    # ---- Layer 3: (BM, 256) @ (256, 128) + b3 --------------------------------
    z3 = jnp.dot(h2, w3_ref[...], preferred_element_type=jnp.float32) + b3_ref[...]
    o_ref[...] = z3.astype(o_ref.dtype)                       # lane-dense store


@functools.partial(jax.jit, static_argnames=("block_m", "use_bf16", "out_dtype"))
def deep_kernel_forward(x, params, *, block_m=2048, use_bf16=True,
                        out_dtype=jnp.float32):
    w1, b1, w2, b2, w3, b3 = params
    B, D = x.shape
    H1 = w1.shape[1]
    H2 = w2.shape[1]
    H3 = w3.shape[1]

    # bf16 weights for the MXU layers; biases stay f32 (added post-accumulate).
    if use_bf16:
        w2 = w2.astype(jnp.bfloat16)
        w3 = w3.astype(jnp.bfloat16)
        if D > 8:
            w1 = w1.astype(jnp.bfloat16)   # layer 1 also goes on the MXU then

    # Batch tile: multiple of 256 keeps MXU tiles and (8,128) layout clean.
    bm = min(block_m, _round_up(B, 256))
    # Give v7x's two TensorCores at least 2 grid steps for mid-size batches.
    if B >= 512 and pl.cdiv(B, bm) < 2:
        bm = _round_up(pl.cdiv(B, 2), 256)

    # Ragged last block handled by Pallas masking -> no pad/slice HBM round trip.
    grid = (pl.cdiv(B, bm),)

    out = pl.pallas_call(
        deep_kernel_kernel,
        out_shape=jax.ShapeDtypeStruct((B, H3), out_dtype),
        grid=grid,
        in_specs=[
            pl.BlockSpec((bm, D), lambda i: (i, 0)),     # x: streamed per step
            pl.BlockSpec((D, H1), lambda i: (0, 0)),     # W1: resident
            pl.BlockSpec((1, H1), lambda i: (0, 0)),     # b1: resident (f32)
            pl.BlockSpec((H1, H2), lambda i: (0, 0)),    # W2: resident (bf16)
            pl.BlockSpec((1, H2), lambda i: (0, 0)),     # b2: resident (f32)
            pl.BlockSpec((H2, H3), lambda i: (0, 0)),    # W3: resident (bf16)
            pl.BlockSpec((1, H3), lambda i: (0, 0)),     # b3: resident (f32)
        ],
        out_specs=pl.BlockSpec((bm, H3), lambda i: (i, 0)),
        compiler_params=pltpu.CompilerParams(
            dimension_semantics=("parallel",),           # shard steps on v7x's 2 TCs
            vmem_limit_bytes=32 * 1024 * 1024,           # headroom on v5e (16 MiB default)
        ),
    )(x, w1, b1, w2, b2, w3, b3)

    return out


def init_params(key, input_dim, h1=128, h2=256, h3=128):
    # Deterministic synthetic init (PyTorch-style uniform bounds), not a checkpoint load.
    keys = jax.random.split(key, 6)

    def lin_init(kw, kb, fan_in, fan_out):
        bound = 1.0 / jnp.sqrt(jnp.float32(fan_in))
        w = jax.random.uniform(kw, (fan_in, fan_out), jnp.float32, -bound, bound)
        b = jax.random.uniform(kb, (1, fan_out), jnp.float32, -bound, bound)
        return w, b

    w1, b1 = lin_init(keys[0], keys[1], input_dim, h1)
    w2, b2 = lin_init(keys[2], keys[3], h1, h2)
    w3, b3 = lin_init(keys[4], keys[5], h2, h3)
    return (w1, b1, w2, b2, w3, b3)


def deep_kernel_reference(x, params, use_bf16=False):
    w1, b1, w2, b2, w3, b3 = params
    if use_bf16:
        w2 = w2.astype(jnp.bfloat16)
        w3 = w3.astype(jnp.bfloat16)
    h1 = jnp.maximum(
        jnp.dot(x, w1, precision=jax.lax.Precision.HIGHEST) + b1, 0.0)
    if use_bf16:
        h1 = h1.astype(jnp.bfloat16)
    z2 = jnp.dot(h1, w2, preferred_element_type=jnp.float32) + b2
    h2 = jnp.maximum(z2, 0.0)
    if use_bf16:
        h2 = h2.astype(jnp.bfloat16)
    return jnp.dot(h2, w3, preferred_element_type=jnp.float32) + b3


if __name__ == "__main__":
    key = jax.random.PRNGKey(0)
    k_param, k_x = jax.random.split(key)

    batch = 300        # not a multiple of the tile -> exercises ragged last block
    input_dim = 4

    params = init_params(k_param, input_dim)
    x = jax.random.normal(k_x, (batch, input_dim), jnp.float32)

    # Small block so the demo exercises a 2-step grid (256 + ragged 44 rows).
    out = deep_kernel_forward(x, params, block_m=256)
    out = jax.block_until_ready(out)
    assert out.shape == (batch, 128), out.shape

    # Tight check against a reference that mirrors the kernel's bf16 MXU math.
    ref_bf16 = deep_kernel_reference(x, params, use_bf16=True)
    assert jnp.allclose(out, ref_bf16, atol=5e-3, rtol=5e-3), \
        float(jnp.max(jnp.abs(out - ref_bf16)))

    # Loose check against the pure-f32 PyTorch-equivalent forward.
    ref_f32 = deep_kernel_reference(x, params, use_bf16=False)
    assert jnp.allclose(out, ref_f32, atol=5e-2, rtol=5e-2), \
        float(jnp.max(jnp.abs(out - ref_f32)))

    print("KERNEL_OK")
</pallas_src>

<mosaic_0001>
module attributes {stable_mosaic.version = 11 : i64} {
  func.func @deep_kernel_kernel(%arg0: i32, %arg1: memref<256x4xf32, #tpu.memory_space<vmem>>, %arg2: memref<4x128xf32, #tpu.memory_space<vmem>>, %arg3: memref<1x128xf32, #tpu.memory_space<vmem>>, %arg4: memref<128x256xbf16, #tpu.memory_space<vmem>>, %arg5: memref<1x256xf32, #tpu.memory_space<vmem>>, %arg6: memref<256x128xbf16, #tpu.memory_space<vmem>>, %arg7: memref<1x128xf32, #tpu.memory_space<vmem>>, %arg8: memref<256x128xf32, #tpu.memory_space<vmem>>) attributes {dimension_semantics = [#tpu.dimension_semantics<parallel>], iteration_bounds = array<i64: 2>, scalar_prefetch = 0 : i64, scratch_operands = 0 : i64, tpu.core_type = #tpu.core_type<tc>, window_params = [{transform_indices = @transform_0, window_bounds = array<i64: 256, 4>}, {pipeline_mode = #tpu.pipeline_mode<synchronous>, transform_indices = @transform_1, window_bounds = array<i64: 4, 128>}, {pipeline_mode = #tpu.pipeline_mode<synchronous>, transform_indices = @transform_2, window_bounds = array<i64: 1, 128>}, {pipeline_mode = #tpu.pipeline_mode<synchronous>, transform_indices = @transform_3, window_bounds = array<i64: 128, 256>}, {pipeline_mode = #tpu.pipeline_mode<synchronous>, transform_indices = @transform_4, window_bounds = array<i64: 1, 256>}, {pipeline_mode = #tpu.pipeline_mode<synchronous>, transform_indices = @transform_5, window_bounds = array<i64: 256, 128>}, {pipeline_mode = #tpu.pipeline_mode<synchronous>, transform_indices = @transform_6, window_bounds = array<i64: 1, 128>}, {transform_indices = @transform_7, window_bounds = array<i64: 256, 128>}]} {
    %c0 = arith.constant 0 : index
    %c0_0 = arith.constant 0 : index
    %0 = vector.load %arg1[%c0, %c0_0] : memref<256x4xf32, #tpu.memory_space<vmem>>, vector<256x4xf32>
    %c0_1 = arith.constant 0 : index
    %c0_2 = arith.constant 0 : index
    %1 = vector.load %arg2[%c0_1, %c0_2] : memref<4x128xf32, #tpu.memory_space<vmem>>, vector<4x128xf32>
    %2 = vector.extract_strided_slice %0 {offsets = [0, 0], sizes = [256, 1], strides = [1, 1]} : vector<256x4xf32> to vector<256x1xf32>
    %3 = vector.extract_strided_slice %1 {offsets = [0, 0], sizes = [1, 128], strides = [1, 1]} : vector<4x128xf32> to vector<1x128xf32>
    %4 = vector.broadcast %2 : vector<256x1xf32> to vector<256x128xf32>
    %5 = vector.broadcast %3 : vector<1x128xf32> to vector<256x128xf32>
    %6 = arith.mulf %4, %5 : vector<256x128xf32>
    %c0_3 = arith.constant 0 : index
    %c0_4 = arith.constant 0 : index
    %7 = vector.load %arg3[%c0_3, %c0_4] : memref<1x128xf32, #tpu.memory_space<vmem>>, vector<1x128xf32>
    %8 = vector.broadcast %7 : vector<1x128xf32> to vector<256x128xf32>
    %9 = arith.addf %6, %8 : vector<256x128xf32>
    %10 = vector.extract_strided_slice %0 {offsets = [0, 1], sizes = [256, 1], strides = [1, 1]} : vector<256x4xf32> to vector<256x1xf32>
    %11 = vector.extract_strided_slice %1 {offsets = [1, 0], sizes = [1, 128], strides = [1, 1]} : vector<4x128xf32> to vector<1x128xf32>
    %12 = vector.broadcast %10 : vector<256x1xf32> to vector<256x128xf32>
    %13 = vector.broadcast %11 : vector<1x128xf32> to vector<256x128xf32>
    %14 = arith.mulf %12, %13 : vector<256x128xf32>
    %15 = arith.addf %9, %14 : vector<256x128xf32>
    %16 = vector.extract_strided_slice %0 {offsets = [0, 2], sizes = [256, 1], strides = [1, 1]} : vector<256x4xf32> to vector<256x1xf32>
    %17 = vector.extract_strided_slice %1 {offsets = [2, 0], sizes = [1, 128], strides = [1, 1]} : vector<4x128xf32> to vector<1x128xf32>
    %18 = vector.broadcast %16 : vector<256x1xf32> to vector<256x128xf32>
    %19 = vector.broadcast %17 : vector<1x128xf32> to vector<256x128xf32>
    %20 = arith.mulf %18, %19 : vector<256x128xf32>
    %21 = arith.addf %15, %20 : vector<256x128xf32>
    %22 = vector.extract_strided_slice %0 {offsets = [0, 3], sizes = [256, 1], strides = [1, 1]} : vector<256x4xf32> to vector<256x1xf32>
    %23 = vector.extract_strided_slice %1 {offsets = [3, 0], sizes = [1, 128], strides = [1, 1]} : vector<4x128xf32> to vector<1x128xf32>
    %24 = vector.broadcast %22 : vector<256x1xf32> to vector<256x128xf32>
    %25 = vector.broadcast %23 : vector<1x128xf32> to vector<256x128xf32>
    %26 = arith.mulf %24, %25 : vector<256x128xf32>
    %27 = arith.addf %21, %26 : vector<256x128xf32>
    %cst = arith.constant 0.000000e+00 : f32
    %28 = vector.broadcast %cst : f32 to vector<256x128xf32>
    %29 = arith.maximumf %27, %28 : vector<256x128xf32>
    %30 = arith.truncf %29 : vector<256x128xf32> to vector<256x128xbf16>
    %c0_5 = arith.constant 0 : index
    %c0_6 = arith.constant 0 : index
    %31 = vector.load %arg4[%c0_5, %c0_6] : memref<128x256xbf16, #tpu.memory_space<vmem>>, vector<128x256xbf16>
    %cst_7 = arith.constant dense<0.000000e+00> : vector<256x256xf32>
    %32 = tpu.matmul %30, %31, %cst_7 {dimension_numbers = #tpu.dot_dimension_numbers<[1], [0], [0], [1], [0, 0, 1, 1], [], []>} : vector<256x128xbf16>, vector<128x256xbf16>, vector<256x256xf32> -> vector<256x256xf32>
    %c0_8 = arith.constant 0 : index
    %c0_9 = arith.constant 0 : index
    %33 = vector.load %arg5[%c0_8, %c0_9] : memref<1x256xf32, #tpu.memory_space<vmem>>, vector<1x256xf32>
    %34 = vector.broadcast %33 : vector<1x256xf32> to vector<256x256xf32>
    %35 = arith.addf %32, %34 : vector<256x256xf32>
    %cst_10 = arith.constant 0.000000e+00 : f32
    %36 = vector.broadcast %cst_10 : f32 to vector<256x256xf32>
    %37 = arith.maximumf %35, %36 : vector<256x256xf32>
    %38 = arith.truncf %37 : vector<256x256xf32> to vector<256x256xbf16>
    %c0_11 = arith.constant 0 : index
    %c0_12 = arith.constant 0 : index
    %39 = vector.load %arg6[%c0_11, %c0_12] : memref<256x128xbf16, #tpu.memory_space<vmem>>, vector<256x128xbf16>
    %cst_13 = arith.constant dense<0.000000e+00> : vector<256x128xf32>
    %40 = tpu.matmul %38, %39, %cst_13 {dimension_numbers = #tpu.dot_dimension_numbers<[1], [0], [0], [1], [0, 0, 1, 1], [], []>} : vector<256x256xbf16>, vector<256x128xbf16>, vector<256x128xf32> -> vector<256x128xf32>
    %c0_14 = arith.constant 0 : index
    %c0_15 = arith.constant 0 : index
    %41 = vector.load %arg7[%c0_14, %c0_15] : memref<1x128xf32, #tpu.memory_space<vmem>>, vector<1x128xf32>
    %42 = vector.broadcast %41 : vector<1x128xf32> to vector<256x128xf32>
    %43 = arith.addf %40, %42 : vector<256x128xf32>
    %c0_16 = arith.constant 0 : index
    %c0_17 = arith.constant 0 : index
    %44 = vector.load %arg8[%c0_16, %c0_17] : memref<256x128xf32, #tpu.memory_space<vmem>>, vector<256x128xf32>
    tpu.vector_store %arg8[%c0_16, %c0_17], %43 {strides = array<i32>} : memref<256x128xf32, #tpu.memory_space<vmem>>, vector<256x128xf32>,
    return
  }
  func.func @transform_0(%arg0: i32) -> (i32, i32) {
    %c0_i32 = arith.constant 0 : i32
    %c0_i32_0 = arith.constant 0 : i32
    return %arg0, %c0_i32 : i32, i32
  }
  func.func @transform_1(%arg0: i32) -> (i32, i32) {
    %c0_i32 = arith.constant 0 : i32
    %c0_i32_0 = arith.constant 0 : i32
    %c0_i32_1 = arith.constant 0 : i32
    return %c0_i32, %c0_i32_0 : i32, i32
  }
  func.func @transform_2(%arg0: i32) -> (i32, i32) {
    %c0_i32 = arith.constant 0 : i32
    %c0_i32_0 = arith.constant 0 : i32
    %c0_i32_1 = arith.constant 0 : i32
    return %c0_i32, %c0_i32_0 : i32, i32
  }
  func.func @transform_3(%arg0: i32) -> (i32, i32) {
    %c0_i32 = arith.constant 0 : i32
    %c0_i32_0 = arith.constant 0 : i32
    %c0_i32_1 = arith.constant 0 : i32
    return %c0_i32, %c0_i32_0 : i32, i32
  }
  func.func @transform_4(%arg0: i32) -> (i32, i32) {
    %c0_i32 = arith.constant 0 : i32
    %c0_i32_0 = arith.constant 0 : i32
    %c0_i32_1 = arith.constant 0 : i32
    return %c0_i32, %c0_i32_0 : i32, i32
  }
  func.func @transform_5(%arg0: i32) -> (i32, i32) {
    %c0_i32 = arith.constant 0 : i32
    %c0_i32_0 = arith.constant 0 : i32
    %c0_i32_1 = arith.constant 0 : i32
    return %c0_i32, %c0_i32_0 : i32, i32
  }
  func.func @transform_6(%arg0: i32) -> (i32, i32) {
    %c0_i32 = arith.constant 0 : i32
    %c0_i32_0 = arith.constant 0 : i32
    %c0_i32_1 = arith.constant 0 : i32
    return %c0_i32, %c0_i32_0 : i32, i32
  }
  func.func @transform_7(%arg0: i32) -> (i32, i32) {
    %c0_i32 = arith.constant 0 : i32
    %c0_i32_0 = arith.constant 0 : i32
    return %arg0, %c0_i32 : i32, i32
  }
}

</mosaic_0001>

<llo_original>
// kernel: deep_kernel_forward.1
$region0: #{deep_kernel_forward.1}
  #allocation0 [shape = 'u32[]', space=smem, size = 0x4, offset = 0x4, fixed_abs, tag = 'smem constant byte address 0x4 - core index']
  #allocation1 [shape = 'u32[72,128]{1,0:T(1,128)}', space=vmem, size = 0x9000, scoped, tag = 'internal scratch']
  %s0 = inlined_call_operand.vmem [shape: f32[300,4], index: 0, kind: input, shape index: {}]
  %s1 = inlined_call_operand.vmem [shape: f32[4,128], index: 1, kind: input, shape index: {}]
  %s2 = inlined_call_operand.vmem [shape: f32[1,128], index: 2, kind: input, shape index: {}]
  %s3 = inlined_call_operand.vmem [shape: bf16[128,256], index: 3, kind: input, shape index: {}]
  %s4 = inlined_call_operand.vmem [shape: f32[1,256], index: 4, kind: input, shape index: {}]
  %s5 = inlined_call_operand.vmem [shape: bf16[256,128], index: 5, kind: input, shape index: {}]
  %s6 = inlined_call_operand.vmem [shape: f32[1,128], index: 6, kind: input, shape index: {}]
  %s7 = inlined_call_operand.hbm [shape: f32[300,128], index: 7, kind: output, shape index: {}]
  %s8 = sld [smem:[#allocation0]]
  $region61: #{deep_kernel_forward.1} parent=0
    _
  %s10 = ssub.s32 1, %s8
  %s11 = scalar_select 0, %s10, %s8
  $region1: #{deep_kernel_forward.1} parent=0
    #allocation2 [shape = 'u8[262144]{0}', space=vmem, size = 0x40000, scoped, tag = 'output window, operand 0']
    #allocation3 [shape = 's32[2]{0}', space=sflag, size = 0x8, scoped, tag = 'scoped memory for deep_kernel_forward.1']
    %12 = vsyncpa [#allocation3], 0
    %s13 = scalar_lea.sflag [#allocation3], 1
    %14 = vsyncpa %s13, 0
    loop: start=0, step=1, limit=4
    $region2: #{deep_kernel_forward.1} parent=1 // loop_pre_header
      _
    $region3: #{deep_kernel_forward.1} parent=1 // loop_header
      %s16 = sphi 0, %s20
      %p17 = scmp.ge.s32.totalorder %s16, 4
      %s26 = sphi 0, %s28
      %s29 = sphi 0, %s26
      %s30 = sphi 0, %s29
      %s46 = sphi 0, %s30
      %s50 = sphi 0, %s50
      %s52 = sphi 0, %s50
      %s53 = sphi 0, %s52
      %s67 = sphi 0, %s53
      %s71 = sphi 0, %s71
      %s73 = sphi 0, %s71
      %s74 = sphi 0, %s73
      %s88 = sphi 0, %s74
      %s92 = sphi 0, %s92
      %s94 = sphi 0, %s92
      %s95 = sphi 0, %s94
      %s109 = sphi 0, %s95
      %s113 = sphi 0, %s113
      %s115 = sphi 0, %s113
      %s116 = sphi 0, %s115
      %s130 = sphi 0, %s116
      %s134 = sphi 0, %s134
      %s136 = sphi 0, %s134
      %s137 = sphi 0, %s136
      %s151 = sphi 0, %s137
      %s155 = sphi 0, %s155
      %s157 = sphi 0, %s155
      %s158 = sphi 0, %s157
      %s172 = sphi 0, %s158
      %s178 = sphi 0, %s180
      %s181 = sphi 0, %s178
      %s182 = sphi 0, %s181
      %s198 = sphi 0, %s182
    $region4: #{deep_kernel_forward.1} parent=1 // loop_header_branch
      %19 = sbr.rel (%p17) target = $region8
    $region5: #{deep_kernel_forward.1} parent=1 // loop_body
      %s21 = ssub.s32 %s16, 1
      %s22 = ssub.s32 %s16, 2
      %s23 = sadd.s32 %s16, 1
      %s24 = ssub.s32 %s16, %s23
      %p25 = scmp.eq.s32.totalorder %s24, 0
      %s27 = sadd.s32 %s26, 1
      %s28 = scalar_select %p25, %s26, %s27
      %p31 = pneg %p25
      %p32 = scmp.eq.s32.totalorder %s16, 1
      %p33 = por %p31, %p32
      %p34 = scmp.ne.s32.totalorder %s26, %s29
      %p35 = scmp.eq.s32.totalorder %s16, 0
      %p36 = por %p34, %p35
      %p37 = scmp.ne.s32.totalorder %s26, %s29
      %p38 = scmp.eq.s32.totalorder %s21, 1
      %p39 = por %p37, %p38
      %p40 = scmp.ne.s32.totalorder %s29, %s30
      %p41 = scmp.eq.s32.totalorder %s21, 0
      %p42 = por %p40, %p41
      %p43 = scmp.ne.s32.totalorder %s29, %s30
      %p44 = scmp.eq.s32.totalorder %s22, 1
      %p45 = por %p43, %p44
      %p47 = scmp.ne.s32.totalorder %s30, %s46
      %p48 = scmp.eq.s32.totalorder %s22, 0
      %p49 = por %p47, %p48
      %s51 = sadd.s32 %s50, 1
      %p54 = scmp.eq.s32.totalorder %s16, 1
      %p55 = scmp.ne.s32.totalorder %s50, %s52
      %p56 = scmp.eq.s32.totalorder %s16, 0
      %p57 = por %p55, %p56
      %p58 = scmp.ne.s32.totalorder %s50, %s52
      %p59 = scmp.eq.s32.totalorder %s21, 1
      %p60 = por %p58, %p59
      %p61 = scmp.ne.s32.totalorder %s52, %s53
      %p62 = scmp.eq.s32.totalorder %s21, 0
      %p63 = por %p61, %p62
      %p64 = scmp.ne.s32.totalorder %s52, %s53
      %p65 = scmp.eq.s32.totalorder %s22, 1
      %p66 = por %p64, %p65
      %p68 = scmp.ne.s32.totalorder %s53, %s67
      %p69 = scmp.eq.s32.totalorder %s22, 0
      %p70 = por %p68, %p69
      %s72 = sadd.s32 %s71, 1
      %p75 = scmp.eq.s32.totalorder %s16, 1
      %p76 = scmp.ne.s32.totalorder %s71, %s73
      %p77 = scmp.eq.s32.totalorder %s16, 0
      %p78 = por %p76, %p77
      %p79 = scmp.ne.s32.totalorder %s71, %s73
      %p80 = scmp.eq.s32.totalorder %s21, 1
      %p81 = por %p79, %p80
      %p82 = scmp.ne.s32.totalorder %s73, %s74
      %p83 = scmp.eq.s32.totalorder %s21, 0
      %p84 = por %p82, %p83
      %p85 = scmp.ne.s32.totalorder %s73, %s74
      %p86 = scmp.eq.s32.totalorder %s22, 1
      %p87 = por %p85, %p86
      %p89 = scmp.ne.s32.totalorder %s74, %s88
      %p90 = scmp.eq.s32.totalorder %s22, 0
      %p91 = por %p89, %p90
      %s93 = sadd.s32 %s92, 1
      %p96 = scmp.eq.s32.totalorder %s16, 1
      %p97 = scmp.ne.s32.totalorder %s92, %s94
      %p98 = scmp.eq.s32.totalorder %s16, 0
      %p99 = por %p97, %p98
      %p100 = scmp.ne.s32.totalorder %s92, %s94
      %p101 = scmp.eq.s32.totalorder %s21, 1
      %p102 = por %p100, %p101
      %p103 = scmp.ne.s32.totalorder %s94, %s95
      %p104 = scmp.eq.s32.totalorder %s21, 0
      %p105 = por %p103, %p104
      %p106 = scmp.ne.s32.totalorder %s94, %s95
      %p107 = scmp.eq.s32.totalorder %s22, 1
      %p108 = por %p106, %p107
      %p110 = scmp.ne.s32.totalorder %s95, %s109
      %p111 = scmp.eq.s32.totalorder %s22, 0
      %p112 = por %p110, %p111
      %s114 = sadd.s32 %s113, 1
      %p117 = scmp.eq.s32.totalorder %s16, 1
      %p118 = scmp.ne.s32.totalorder %s113, %s115
      %p119 = scmp.eq.s32.totalorder %s16, 0
      %p120 = por %p118, %p119
      %p121 = scmp.ne.s32.totalorder %s113, %s115
      %p122 = scmp.eq.s32.totalorder %s21, 1
      %p123 = por %p121, %p122
      %p124 = scmp.ne.s32.totalorder %s115, %s116
      %p125 = scmp.eq.s32.totalorder %s21, 0
      %p126 = por %p124, %p125
      %p127 = scmp.ne.s32.totalorder %s115, %s116
      %p128 = scmp.eq.s32.totalorder %s22, 1
      %p129 = por %p127, %p128
      %p131 = scmp.ne.s32.totalorder %s116, %s130
      %p132 = scmp.eq.s32.totalorder %s22, 0
      %p133 = por %p131, %p132
      %s135 = sadd.s32 %s134, 1
      %p138 = scmp.eq.s32.totalorder %s16, 1
      %p139 = scmp.ne.s32.totalorder %s134, %s136
      %p140 = scmp.eq.s32.totalorder %s16, 0
      %p141 = por %p139, %p140
      %p142 = scmp.ne.s32.totalorder %s134, %s136
      %p143 = scmp.eq.s32.totalorder %s21, 1
      %p144 = por %p142, %p143
      %p145 = scmp.ne.s32.totalorder %s136, %s137
      %p146 = scmp.eq.s32.totalorder %s21, 0
      %p147 = por %p145, %p146
      %p148 = scmp.ne.s32.totalorder %s136, %s137
      %p149 = scmp.eq.s32.totalorder %s22, 1
      %p150 = por %p148, %p149
      %p152 = scmp.ne.s32.totalorder %s137, %s151
      %p153 = scmp.eq.s32.totalorder %s22, 0
      %p154 = por %p152, %p153
      %s156 = sadd.s32 %s155, 1
      %p159 = scmp.eq.s32.totalorder %s16, 1
      %p160 = scmp.ne.s32.totalorder %s155, %s157
      %p161 = scmp.eq.s32.totalorder %s16, 0
      %p162 = por %p160, %p161
      %p163 = scmp.ne.s32.totalorder %s155, %s157
      %p164 = scmp.eq.s32.totalorder %s21, 1
      %p165 = por %p163, %p164
      %p166 = scmp.ne.s32.totalorder %s157, %s158
      %p167 = scmp.eq.s32.totalorder %s21, 0
      %p168 = por %p166, %p167
      %p169 = scmp.ne.s32.totalorder %s157, %s158
      %p170 = scmp.eq.s32.totalorder %s22, 1
      %p171 = por %p169, %p170
      %p173 = scmp.ne.s32.totalorder %s158, %s172
      %p174 = scmp.eq.s32.totalorder %s22, 0
      %p175 = por %p173, %p174
      %s176 = ssub.s32 %s16, %s23
      %p177 = scmp.eq.s32.totalorder %s176, 0
      %s179 = sadd.s32 %s178, 1
      %s180 = scalar_select %p177, %s178, %s179
      %p183 = pneg %p177
      %p184 = scmp.eq.s32.totalorder %s16, 1
      %p185 = por %p183, %p184
      %p186 = scmp.ne.s32.totalorder %s178, %s181
      %p187 = scmp.eq.s32.totalorder %s16, 0
      %p188 = por %p186, %p187
      %p189 = scmp.ne.s32.totalorder %s178, %s181
      %p190 = scmp.eq.s32.totalorder %s21, 1
      %p191 = por %p189, %p190
      %p192 = scmp.ne.s32.totalorder %s181, %s182
      %p193 = scmp.eq.s32.totalorder %s21, 0
      %p194 = por %p192, %p193
      %p195 = scmp.ne.s32.totalorder %s181, %s182
      %p196 = scmp.eq.s32.totalorder %s22, 1
      %p197 = por %p195, %p196
      %p199 = scmp.ne.s32.totalorder %s182, %s198
      %p200 = scmp.eq.s32.totalorder %s22, 0
      %p201 = por %p199, %p200
      %p202 = scmp.le.s32.totalorder 1, %s16
      %p203 = scmp.lt.s32.totalorder %s16, 3
      %p204 = pnand %p202, %p203
      %p205 = pneg %p204
      // Predicated region
      $region9: #{deep_kernel_forward.1} parent=5 // pred_check
        _
      $region10: #{deep_kernel_forward.1} parent=5 // pred_check_branch
        %207 = sbr.rel (%p204) target = $region12
      $region11: #{deep_kernel_forward.1} parent=5 // pred_region
        %s208 = ssub.s32 %s16, 1
        // Predicated region
        $region13: #{deep_kernel_forward.1} parent=11 // pred_check
          %p209 = pneg %p63
        $region14: #{deep_kernel_forward.1} parent=11 // pred_check_branch
          %211 = sbr.rel (%p209) target = $region16
        $region15: #{deep_kernel_forward.1} parent=11 // pred_region
          _
        $region16: #{deep_kernel_forward.1} parent=11 // pred_fallthru
          _
        // Predicated region
        $region17: #{deep_kernel_forward.1} parent=11 // pred_check
          %p212 = pneg %p84
        $region18: #{deep_kernel_forward.1} parent=11 // pred_check_branch
          %214 = sbr.rel (%p212) target = $region20
        $region19: #{deep_kernel_forward.1} parent=11 // pred_region
          _
        $region20: #{deep_kernel_forward.1} parent=11 // pred_fallthru
          _
        // Predicated region
        $region21: #{deep_kernel_forward.1} parent=11 // pred_check
          %p215 = pneg %p105
        $region22: #{deep_kernel_forward.1} parent=11 // pred_check_branch
          %217 = sbr.rel (%p215) target = $region24
        $region23: #{deep_kernel_forward.1} parent=11 // pred_region
          _
        $region24: #{deep_kernel_forward.1} parent=11 // pred_fallthru
          _
        // Predicated region
        $region25: #{deep_kernel_forward.1} parent=11 // pred_check
          %p218 = pneg %p126
        $region26: #{deep_kernel_forward.1} parent=11 // pred_check_branch
          %220 = sbr.rel (%p218) target = $region28
        $region27: #{deep_kernel_forward.1} parent=11 // pred_region
          _
        $region28: #{deep_kernel_forward.1} parent=11 // pred_fallthru
          _
        // Predicated region
        $region29: #{deep_kernel_forward.1} parent=11 // pred_check
          %p221 = pneg %p147
        $region30: #{deep_kernel_forward.1} parent=11 // pred_check_branch
          %223 = sbr.rel (%p221) target = $region32
        $region31: #{deep_kernel_forward.1} parent=11 // pred_region
          _
        $region32: #{deep_kernel_forward.1} parent=11 // pred_fallthru
          _
        // Predicated region
        $region33: #{deep_kernel_forward.1} parent=11 // pred_check
          %p224 = pneg %p168
        $region34: #{deep_kernel_forward.1} parent=11 // pred_check_branch
          %226 = sbr.rel (%p224) target = $region36
        $region35: #{deep_kernel_forward.1} parent=11 // pred_region
          _
        $region36: #{deep_kernel_forward.1} parent=11 // pred_fallthru
          _
      $region12: #{deep_kernel_forward.1} parent=5 // pred_fallthru
        _
      %p227 = scmp.lt.s32.totalorder %s16, 2
      // Predicated region
      $region37: #{deep_kernel_forward.1} parent=5 // pred_check
        %p228 = pneg %p227
      $region38: #{deep_kernel_forward.1} parent=5 // pred_check_branch
        %230 = sbr.rel (%p228) target = $region40
      $region39: #{deep_kernel_forward.1} parent=5 // pred_region
        // Predicated region
        $region41: #{deep_kernel_forward.1} parent=39 // pred_check
          %p231 = pneg %p36
        $region42: #{deep_kernel_forward.1} parent=39 // pred_check_branch
          %233 = sbr.rel (%p231) target = $region44
        $region43: #{deep_kernel_forward.1} parent=39 // pred_region
          %s234 = smul.u32 32, %s16
          %s235 = ssub.s32 38, %s234
          %p236 = scmp.lt.s32.totalorder %s235, 32
          %s237 = scalar_select %p236, %s235, 32
          %s238 = smul.u32 8, %s237
          %p239 = scmp.lt.s32.totalorder %s234, 37
          %s240 = scalar_select %p239, %s234, 37
          %s241 = smul.addr %s240, 8
          %s242 = scalar_lea.vmem %s0, %s241
          %s243 = smul.u32 32, %s16
          %s244 = ssub.s32 38, %s243
          %p245 = scmp.lt.s32.totalorder %s244, 32
          %s246 = scalar_select %p245, %s244, 32
          %s247 = smul.u32 8, %s246
        $region44: #{deep_kernel_forward.1} parent=39 // pred_fallthru
          _
      $region40: #{deep_kernel_forward.1} parent=5 // pred_fallthru
        _
      %p248 = scmp.le.s32.totalorder 1, %s16
      %p249 = scmp.lt.s32.totalorder %s16, 3
      %p250 = pnand %p248, %p249
      %p251 = pneg %p250
      // Predicated region
      $region45: #{deep_kernel_forward.1} parent=5 // pred_check
        _
      $region46: #{deep_kernel_forward.1} parent=5 // pred_check_branch
        %253 = sbr.rel (%p250) target = $region48
      $region47: #{deep_kernel_forward.1} parent=5 // pred_region
        %s254 = ssub.s32 %s16, 1
        %s255 = smul.u32 32, %s21
        %s256 = ssub.s32 38, %s255
        %p257 = scmp.lt.s32.totalorder %s256, 32
        %s258 = scalar_select %p257, %s256, 32
        %s259 = smul.u32 8, %s258
        %p260 = scmp.lt.s32.totalorder %s255, 37
        %s261 = scalar_select %p260, %s255, 37
        %s262 = smul.addr %s261, 8
        %s263 = scalar_lea.vmem %s0, %s262
        %p264 = pneg %p42
        %p265 = pneg %p39
        %p266 = pneg %p63
        %p267 = pneg %p60
        %p268 = pneg %p84
        %p269 = pneg %p81
        %p270 = pneg %p105
        %p271 = pneg %p102
        %p272 = pneg %p126
        %p273 = pneg %p123
        %p274 = pneg %p147
        %p275 = pneg %p144
        %p276 = pneg %p168
        %p277 = pneg %p165
        %p278 = pneg %p194
        %p279 = pneg %p191
        %s280 = sand.u32 %s181, 1
        %s281 = scalar_lea.sflag [#allocation3], %s280
        %s282 = sand.u32 %s181, 1
        %s283 = smul.addr %s282, 256
        %s284 = scalar_lea.vmem [#allocation2], %s283
        %s285 = smul.u32 32, %s21
        %s286 = ssub.s32 38, %s285
        %p287 = scmp.lt.s32.totalorder %s286, 32
        %s288 = scalar_select %p287, %s286, 32
        %s289 = smul.u32 8, %s288
        %p290 = scmp.lt.s32.totalorder %s285, 37
        %s291 = scalar_select %p290, %s285, 37
        %s292 = smul.addr %s291, 8
        %s293 = scalar_lea.vmem %s0, %s292
        %s294 = smul.u32 32, %s21
        %s295 = ssub.s32 38, %s294
        %p296 = scmp.lt.s32.totalorder %s295, 32
        %s297 = scalar_select %p296, %s295, 32
        %s298 = smul.u32 8, %s297
        %s299 = smul.u32 32, %s21
        %s300 = ssub.s32 38, %s299
        %p301 = scmp.lt.s32.totalorder %s300, 32
        %s302 = scalar_select %p301, %s300, 32
        %s303 = smul.u32 8, %s302
        %v304 = vld [vmem:[%s293] sm:$0xff]
        %v305 = vld [vmem:[%s293 + $0x8] sm:$0xff]
        %v306 = vld [vmem:[%s293 + $0x10] sm:$0xff]
        %v307 = vld [vmem:[%s293 + $0x18] sm:$0xff]
        %v308 = vld [vmem:[%s293 + $0x20] sm:$0xff]
        %v309 = vld [vmem:[%s293 + $0x28] sm:$0xff]
        %v310 = vld [vmem:[%s293 + $0x30] sm:$0xff]
        %v311 = vld [vmem:[%s293 + $0x38] sm:$0xff]
        %v312 = vld [vmem:[%s293 + $0x40] sm:$0xff]
        %v313 = vld [vmem:[%s293 + $0x48] sm:$0xff]
        %v314 = vld [vmem:[%s293 + $0x50] sm:$0xff]
        %v315 = vld [vmem:[%s293 + $0x58] sm:$0xff]
        %v316 = vld [vmem:[%s293 + $0x60] sm:$0xff]
        %v317 = vld [vmem:[%s293 + $0x68] sm:$0xff]
        %v318 = vld [vmem:[%s293 + $0x70] sm:$0xff]
        %v319 = vld [vmem:[%s293 + $0x78] sm:$0xff]
        %v320 = vld [vmem:[%s293 + $0x80] sm:$0xff]
        %v321 = vld [vmem:[%s293 + $0x88] sm:$0xff]
        %v322 = vld [vmem:[%s293 + $0x90] sm:$0xff]
        %v323 = vld [vmem:[%s293 + $0x98] sm:$0xff]
        %v324 = vld [vmem:[%s293 + $0xa0] sm:$0xff]
        %v325 = vld [vmem:[%s293 + $0xa8] sm:$0xff]
        %v326 = vld [vmem:[%s293 + $0xb0] sm:$0xff]
        %v327 = vld [vmem:[%s293 + $0xb8] sm:$0xff]
        %v328 = vld [vmem:[%s293 + $0xc0] sm:$0xff]
        %v329 = vld [vmem:[%s293 + $0xc8] sm:$0xff]
        %v330 = vld [vmem:[%s293 + $0xd0] sm:$0xff]
        %v331 = vld [vmem:[%s293 + $0xd8] sm:$0xff]
        %v332 = vld [vmem:[%s293 + $0xe0] sm:$0xff]
        %v333 = vld [vmem:[%s293 + $0xe8] sm:$0xff]
        %v334 = vld [vmem:[%s293 + $0xf0] sm:$0xff]
        %v335 = vld [vmem:[%s293 + $0xf8] sm:$0xff]
        %v336 = vld [vmem:[%s1] sm:$0xf]
        %338 = vset.pattern.permute.xlu0 0
        %339 = vperm.xlu0 %338, %v304
        %v340 = vpop.permute.xlu0 %339
        %343 = vset.pattern.permute.xlu0 0
        %344 = vperm.xlu0 %343, %v305
        %v345 = vpop.permute.xlu0 %344
        %348 = vset.pattern.permute.xlu0 0
        %349 = vperm.xlu0 %348, %v306
        %v350 = vpop.permute.xlu0 %349
        %353 = vset.pattern.permute.xlu0 0
        %354 = vperm.xlu0 %353, %v307
        %v355 = vpop.permute.xlu0 %354
        %358 = vset.pattern.permute.xlu0 0
        %359 = vperm.xlu0 %358, %v308
        %v360 = vpop.permute.xlu0 %359
        %363 = vset.pattern.permute.xlu0 0
        %364 = vperm.xlu0 %363, %v309
        %v365 = vpop.permute.xlu0 %364
        %368 = vset.pattern.permute.xlu0 0
        %369 = vperm.xlu0 %368, %v310
        %v370 = vpop.permute.xlu0 %369
        %373 = vset.pattern.permute.xlu0 0
        %374 = vperm.xlu0 %373, %v311
        %v375 = vpop.permute.xlu0 %374
        %378 = vset.pattern.permute.xlu0 0
        %379 = vperm.xlu0 %378, %v312
        %v380 = vpop.permute.xlu0 %379
        %383 = vset.pattern.permute.xlu0 0
        %384 = vperm.xlu0 %383, %v313
        %v385 = vpop.permute.xlu0 %384
        %388 = vset.pattern.permute.xlu0 0
        %389 = vperm.xlu0 %388, %v314
        %v390 = vpop.permute.xlu0 %389
        %393 = vset.pattern.permute.xlu0 0
        %394 = vperm.xlu0 %393, %v315
        %v395 = vpop.permute.xlu0 %394
        %398 = vset.pattern.permute.xlu0 0
        %399 = vperm.xlu0 %398, %v316
        %v400 = vpop.permute.xlu0 %399
        %403 = vset.pattern.permute.xlu0 0
        %404 = vperm.xlu0 %403, %v317
        %v405 = vpop.permute.xlu0 %404
        %408 = vset.pattern.permute.xlu0 0
        %409 = vperm.xlu0 %408, %v318
        %v410 = vpop.permute.xlu0 %409
        %413 = vset.pattern.permute.xlu0 0
        %414 = vperm.xlu0 %413, %v319
        %v415 = vpop.permute.xlu0 %414
        %418 = vset.pattern.permute.xlu0 0
        %419 = vperm.xlu0 %418, %v320
        %v420 = vpop.permute.xlu0 %419
        %423 = vset.pattern.permute.xlu0 0
        %424 = vperm.xlu0 %423, %v321
        %v425 = vpop.permute.xlu0 %424
        %428 = vset.pattern.permute.xlu0 0
        %429 = vperm.xlu0 %428, %v322
        %v430 = vpop.permute.xlu0 %429
        %433 = vset.pattern.permute.xlu0 0
        %434 = vperm.xlu0 %433, %v323
        %v435 = vpop.permute.xlu0 %434
        %438 = vset.pattern.permute.xlu0 0
        %439 = vperm.xlu0 %438, %v324
        %v440 = vpop.permute.xlu0 %439
        %443 = vset.pattern.permute.xlu0 0
        %444 = vperm.xlu0 %443, %v325
        %v445 = vpop.permute.xlu0 %444
        %448 = vset.pattern.permute.xlu0 0
        %449 = vperm.xlu0 %448, %v326
        %v450 = vpop.permute.xlu0 %449
        %453 = vset.pattern.permute.xlu0 0
        %454 = vperm.xlu0 %453, %v327
        %v455 = vpop.permute.xlu0 %454
        %458 = vset.pattern.permute.xlu0 0
        %459 = vperm.xlu0 %458, %v328
        %v460 = vpop.permute.xlu0 %459
        %463 = vset.pattern.permute.xlu0 0
        %464 = vperm.xlu0 %463, %v329
        %v465 = vpop.permute.xlu0 %464
        %468 = vset.pattern.permute.xlu0 0
        %469 = vperm.xlu0 %468, %v330
        %v470 = vpop.permute.xlu0 %469
        %473 = vset.pattern.permute.xlu0 0
        %474 = vperm.xlu0 %473, %v331
        %v475 = vpop.permute.xlu0 %474
        %478 = vset.pattern.permute.xlu0 0
        %479 = vperm.xlu0 %478, %v332
        %v480 = vpop.permute.xlu0 %479
        %483 = vset.pattern.permute.xlu0 0
        %484 = vperm.xlu0 %483, %v333
        %v485 = vpop.permute.xlu0 %484
        %488 = vset.pattern.permute.xlu0 0
        %489 = vperm.xlu0 %488, %v334
        %v490 = vpop.permute.xlu0 %489
        %493 = vset.pattern.permute.xlu0 0
        %494 = vperm.xlu0 %493, %v335
        %v495 = vpop.permute.xlu0 %494
        %v497 = vperm.slane %v336, 0
        %v498 = vmul.f32 %v340, %v497
        %v499 = vmul.f32 %v345, %v497
        %v500 = vmul.f32 %v350, %v497
        %v501 = vmul.f32 %v355, %v497
        %v502 = vmul.f32 %v360, %v497
        %v503 = vmul.f32 %v365, %v497
        %v504 = vmul.f32 %v370, %v497
        %v505 = vmul.f32 %v375, %v497
        %v506 = vmul.f32 %v380, %v497
        %v507 = vmul.f32 %v385, %v497
        %v508 = vmul.f32 %v390, %v497
        %v509 = vmul.f32 %v395, %v497
        %v510 = vmul.f32 %v400, %v497
        %v511 = vmul.f32 %v405, %v497
        %v512 = vmul.f32 %v410, %v497
        %v513 = vmul.f32 %v415, %v497
        %v514 = vmul.f32 %v420, %v497
        %v515 = vmul.f32 %v425, %v497
        %v516 = vmul.f32 %v430, %v497
        %v517 = vmul.f32 %v435, %v497
        %v518 = vmul.f32 %v440, %v497
        %v519 = vmul.f32 %v445, %v497
        %v520 = vmul.f32 %v450, %v497
        %v521 = vmul.f32 %v455, %v497
        %v522 = vmul.f32 %v460, %v497
        %v523 = vmul.f32 %v465, %v497
        %v524 = vmul.f32 %v470, %v497
        %v525 = vmul.f32 %v475, %v497
        %v526 = vmul.f32 %v480, %v497
        %v527 = vmul.f32 %v485, %v497
        %v528 = vmul.f32 %v490, %v497
        %v529 = vmul.f32 %v495, %v497
        %v530 = vld [vmem:[%s2] sm:$0x1]
        %v532 = vperm.slane %v530, 0
        %v534 = vadd.f32 %v498, %v532
        %v535 = vadd.f32 %v499, %v532
        %v536 = vadd.f32 %v500, %v532
        %v537 = vadd.f32 %v501, %v532
        %v538 = vadd.f32 %v502, %v532
        %v539 = vadd.f32 %v503, %v532
        %v540 = vadd.f32 %v504, %v532
        %v541 = vadd.f32 %v505, %v532
        %v542 = vadd.f32 %v506, %v532
        %v543 = vadd.f32 %v507, %v532
        %v544 = vadd.f32 %v508, %v532
        %v545 = vadd.f32 %v509, %v532
        %v546 = vadd.f32 %v510, %v532
        %v547 = vadd.f32 %v511, %v532
        %v548 = vadd.f32 %v512, %v532
        %v549 = vadd.f32 %v513, %v532
        %v550 = vadd.f32 %v514, %v532
        %v551 = vadd.f32 %v515, %v532
        %v552 = vadd.f32 %v516, %v532
        %v553 = vadd.f32 %v517, %v532
        %v554 = vadd.f32 %v518, %v532
        %v555 = vadd.f32 %v519, %v532
        %v556 = vadd.f32 %v520, %v532
        %v557 = vadd.f32 %v521, %v532
        %v558 = vadd.f32 %v522, %v532
        %v559 = vadd.f32 %v523, %v532
        %v560 = vadd.f32 %v524, %v532
        %v561 = vadd.f32 %v525, %v532
        %v562 = vadd.f32 %v526, %v532
        %v563 = vadd.f32 %v527, %v532
        %v564 = vadd.f32 %v528, %v532
        %v565 = vadd.f32 %v529, %v532
        %566 = vset.pattern.permute.xlu0 1
        %567 = vperm.xlu0 %566, %v304
        %v568 = vpop.permute.xlu0 %567
        %570 = vset.pattern.permute.xlu0 1
        %571 = vperm.xlu0 %570, %v305
        %v572 = vpop.permute.xlu0 %571
        %574 = vset.pattern.permute.xlu0 1
        %575 = vperm.xlu0 %574, %v306
        %v576 = vpop.permute.xlu0 %575
        %578 = vset.pattern.permute.xlu0 1
        %579 = vperm.xlu0 %578, %v307
        %v580 = vpop.permute.xlu0 %579
        %582 = vset.pattern.permute.xlu0 1
        %583 = vperm.xlu0 %582, %v308
        %v584 = vpop.permute.xlu0 %583
        %586 = vset.pattern.permute.xlu0 1
        %587 = vperm.xlu0 %586, %v309
        %v588 = vpop.permute.xlu0 %587
        %590 = vset.pattern.permute.xlu0 1
        %591 = vperm.xlu0 %590, %v310
        %v592 = vpop.permute.xlu0 %591
        %594 = vset.pattern.permute.xlu0 1
        %595 = vperm.xlu0 %594, %v311
        %v596 = vpop.permute.xlu0 %595
        %598 = vset.pattern.permute.xlu0 1
        %599 = vperm.xlu0 %598, %v312
        %v600 = vpop.permute.xlu0 %599
        %602 = vset.pattern.permute.xlu0 1
        %603 = vperm.xlu0 %602, %v313
        %v604 = vpop.permute.xlu0 %603
        %606 = vset.pattern.permute.xlu0 1
        %607 = vperm.xlu0 %606, %v314
        %v608 = vpop.permute.xlu0 %607
        %610 = vset.pattern.permute.xlu0 1
        %611 = vperm.xlu0 %610, %v315
        %v612 = vpop.permute.xlu0 %611
        %614 = vset.pattern.permute.xlu0 1
        %615 = vperm.xlu0 %614, %v316
        %v616 = vpop.permute.xlu0 %615
        %618 = vset.pattern.permute.xlu0 1
        %619 = vperm.xlu0 %618, %v317
        %v620 = vpop.permute.xlu0 %619
        %622 = vset.pattern.permute.xlu0 1
        %623 = vperm.xlu0 %622, %v318
        %v624 = vpop.permute.xlu0 %623
        %626 = vset.pattern.permute.xlu0 1
        %627 = vperm.xlu0 %626, %v319
        %v628 = vpop.permute.xlu0 %627
        %630 = vset.pattern.permute.xlu0 1
        %631 = vperm.xlu0 %630, %v320
        %v632 = vpop.permute.xlu0 %631
        %634 = vset.pattern.permute.xlu0 1
        %635 = vperm.xlu0 %634, %v321
        %v636 = vpop.permute.xlu0 %635
        %638 = vset.pattern.permute.xlu0 1
        %639 = vperm.xlu0 %638, %v322
        %v640 = vpop.permute.xlu0 %639
        %642 = vset.pattern.permute.xlu0 1
        %643 = vperm.xlu0 %642, %v323
        %v644 = vpop.permute.xlu0 %643
        %646 = vset.pattern.permute.xlu0 1
        %647 = vperm.xlu0 %646, %v324
        %v648 = vpop.permute.xlu0 %647
        %650 = vset.pattern.permute.xlu0 1
        %651 = vperm.xlu0 %650, %v325
        %v652 = vpop.permute.xlu0 %651
        %654 = vset.pattern.permute.xlu0 1
        %655 = vperm.xlu0 %654, %v326
        %v656 = vpop.permute.xlu0 %655
        %658 = vset.pattern.permute.xlu0 1
        %659 = vperm.xlu0 %658, %v327
        %v660 = vpop.permute.xlu0 %659
        %662 = vset.pattern.permute.xlu0 1
        %663 = vperm.xlu0 %662, %v328
        %v664 = vpop.permute.xlu0 %663
        %666 = vset.pattern.permute.xlu0 1
        %667 = vperm.xlu0 %666, %v329
        %v668 = vpop.permute.xlu0 %667
        %670 = vset.pattern.permute.xlu0 1
        %671 = vperm.xlu0 %670, %v330
        %v672 = vpop.permute.xlu0 %671
        %674 = vset.pattern.permute.xlu0 1
        %675 = vperm.xlu0 %674, %v331
        %v676 = vpop.permute.xlu0 %675
        %678 = vset.pattern.permute.xlu0 1
        %679 = vperm.xlu0 %678, %v332
        %v680 = vpop.permute.xlu0 %679
        %682 = vset.pattern.permute.xlu0 1
        %683 = vperm.xlu0 %682, %v333
        %v684 = vpop.permute.xlu0 %683
        %686 = vset.pattern.permute.xlu0 1
        %687 = vperm.xlu0 %686, %v334
        %v688 = vpop.permute.xlu0 %687
        %690 = vset.pattern.permute.xlu0 1
        %691 = vperm.xlu0 %690, %v335
        %v692 = vpop.permute.xlu0 %691
        %v694 = vperm.slane %v336, 1
        %v695 = vmul.f32 %v568, %v694
        %v696 = vmul.f32 %v572, %v694
        %v697 = vmul.f32 %v576, %v694
        %v698 = vmul.f32 %v580, %v694
        %v699 = vmul.f32 %v584, %v694
        %v700 = vmul.f32 %v588, %v694
        %v701 = vmul.f32 %v592, %v694
        %v702 = vmul.f32 %v596, %v694
        %v703 = vmul.f32 %v600, %v694
        %v704 = vmul.f32 %v604, %v694
        %v705 = vmul.f32 %v608, %v694
        %v706 = vmul.f32 %v612, %v694
        %v707 = vmul.f32 %v616, %v694
        %v708 = vmul.f32 %v620, %v694
        %v709 = vmul.f32 %v624, %v694
        %v710 = vmul.f32 %v628, %v694
        %v711 = vmul.f32 %v632, %v694
        %v712 = vmul.f32 %v636, %v694
        %v713 = vmul.f32 %v640, %v694
        %v714 = vmul.f32 %v644, %v694
        %v715 = vmul.f32 %v648, %v694
        %v716 = vmul.f32 %v652, %v694
        %v717 = vmul.f32 %v656, %v694
        %v718 = vmul.f32 %v660, %v694
        %v719 = vmul.f32 %v664, %v694
        %v720 = vmul.f32 %v668, %v694
        %v721 = vmul.f32 %v672, %v694
        %v722 = vmul.f32 %v676, %v694
        %v723 = vmul.f32 %v680, %v694
        %v724 = vmul.f32 %v684, %v694
        %v725 = vmul.f32 %v688, %v694
        %v726 = vmul.f32 %v692, %v694
        %v727 = vadd.f32 %v534, %v695
        %v728 = vadd.f32 %v535, %v696
        %v729 = vadd.f32 %v536, %v697
        %v730 = vadd.f32 %v537, %v698
        %v731 = vadd.f32 %v538, %v699
        %v732 = vadd.f32 %v539, %v700
        %v733 = vadd.f32 %v540, %v701
        %v734 = vadd.f32 %v541, %v702
        %v735 = vadd.f32 %v542, %v703
        %v736 = vadd.f32 %v543, %v704
        %v737 = vadd.f32 %v544, %v705
        %v738 = vadd.f32 %v545, %v706
        %v739 = vadd.f32 %v546, %v707
        %v740 = vadd.f32 %v547, %v708
        %v741 = vadd.f32 %v548, %v709
        %v742 = vadd.f32 %v549, %v710
        %v743 = vadd.f32 %v550, %v711
        %v744 = vadd.f32 %v551, %v712
        %v745 = vadd.f32 %v552, %v713
        %v746 = vadd.f32 %v553, %v714
        %v747 = vadd.f32 %v554, %v715
        %v748 = vadd.f32 %v555, %v716
        %v749 = vadd.f32 %v556, %v717
        %v750 = vadd.f32 %v557, %v718
        %v751 = vadd.f32 %v558, %v719
        %v752 = vadd.f32 %v559, %v720
        %v753 = vadd.f32 %v560, %v721
        %v754 = vadd.f32 %v561, %v722
        %v755 = vadd.f32 %v562, %v723
        %v756 = vadd.f32 %v563, %v724
        %v757 = vadd.f32 %v564, %v725
        %v758 = vadd.f32 %v565, %v726
        %759 = vset.pattern.permute.xlu0 2
        %760 = vperm.xlu0 %759, %v304
        %v761 = vpop.permute.xlu0 %760
        %763 = vset.pattern.permute.xlu0 2
        %764 = vperm.xlu0 %763, %v305
        %v765 = vpop.permute.xlu0 %764
        %767 = vset.pattern.permute.xlu0 2
        %768 = vperm.xlu0 %767, %v306
        %v769 = vpop.permute.xlu0 %768
        %771 = vset.pattern.permute.xlu0 2
        %772 = vperm.xlu0 %771, %v307
        %v773 = vpop.permute.xlu0 %772
        %775 = vset.pattern.permute.xlu0 2
        %776 = vperm.xlu0 %775, %v308
        %v777 = vpop.permute.xlu0 %776
        %779 = vset.pattern.permute.xlu0 2
        %780 = vperm.xlu0 %779, %v309
        %v781 = vpop.permute.xlu0 %780
        %783 = vset.pattern.permute.xlu0 2
        %784 = vperm.xlu0 %783, %v310
        %v785 = vpop.permute.xlu0 %784
        %787 = vset.pattern.permute.xlu0 2
        %788 = vperm.xlu0 %787, %v311
        %v789 = vpop.permute.xlu0 %788
        %791 = vset.pattern.permute.xlu0 2
        %792 = vperm.xlu0 %791, %v312
        %v793 = vpop.permute.xlu0 %792
        %795 = vset.pattern.permute.xlu0 2
        %796 = vperm.xlu0 %795, %v313
        %v797 = vpop.permute.xlu0 %796
        %799 = vset.pattern.permute.xlu0 2
        %800 = vperm.xlu0 %799, %v314
        %v801 = vpop.permute.xlu0 %800
        %803 = vset.pattern.permute.xlu0 2
        %804 = vperm.xlu0 %803, %v315
        %v805 = vpop.permute.xlu0 %804
        %807 = vset.pattern.permute.xlu0 2
        %808 = vperm.xlu0 %807, %v316
        %v809 = vpop.permute.xlu0 %808
        %811 = vset.pattern.permute.xlu0 2
        %812 = vperm.xlu0 %811, %v317
        %v813 = vpop.permute.xlu0 %812
        %815 = vset.pattern.permute.xlu0 2
        %816 = vperm.xlu0 %815, %v318
        %v817 = vpop.permute.xlu0 %816
        %819 = vset.pattern.permute.xlu0 2
        %820 = vperm.xlu0 %819, %v319
        %v821 = vpop.permute.xlu0 %820
        %823 = vset.pattern.permute.xlu0 2
        %824 = vperm.xlu0 %823, %v320
        %v825 = vpop.permute.xlu0 %824
        %827 = vset.pattern.permute.xlu0 2
        %828 = vperm.xlu0 %827, %v321
        %v829 = vpop.permute.xlu0 %828
        %831 = vset.pattern.permute.xlu0 2
        %832 = vperm.xlu0 %831, %v322
        %v833 = vpop.permute.xlu0 %832
        %835 = vset.pattern.permute.xlu0 2
        %836 = vperm.xlu0 %835, %v323
        %v837 = vpop.permute.xlu0 %836
        %839 = vset.pattern.permute.xlu0 2
        %840 = vperm.xlu0 %839, %v324
        %v841 = vpop.permute.xlu0 %840
        %843 = vset.pattern.permute.xlu0 2
        %844 = vperm.xlu0 %843, %v325
        %v845 = vpop.permute.xlu0 %844
        %847 = vset.pattern.permute.xlu0 2
        %848 = vperm.xlu0 %847, %v326
        %v849 = vpop.permute.xlu0 %848
        %851 = vset.pattern.permute.xlu0 2
        %852 = vperm.xlu0 %851, %v327
        %v853 = vpop.permute.xlu0 %852
        %855 = vset.pattern.permute.xlu0 2
        %856 = vperm.xlu0 %855, %v328
        %v857 = vpop.permute.xlu0 %856
        %859 = vset.pattern.permute.xlu0 2
        %860 = vperm.xlu0 %859, %v329
        %v861 = vpop.permute.xlu0 %860
        %863 = vset.pattern.permute.xlu0 2
        %864 = vperm.xlu0 %863, %v330
        %v865 = vpop.permute.xlu0 %864
        %867 = vset.pattern.permute.xlu0 2
        %868 = vperm.xlu0 %867, %v331
        %v869 = vpop.permute.xlu0 %868
        %871 = vset.pattern.permute.xlu0 2
        %872 = vperm.xlu0 %871, %v332
        %v873 = vpop.permute.xlu0 %872
        %875 = vset.pattern.permute.xlu0 2
        %876 = vperm.xlu0 %875, %v333
        %v877 = vpop.permute.xlu0 %876
        %879 = vset.pattern.permute.xlu0 2
        %880 = vperm.xlu0 %879, %v334
        %v881 = vpop.permute.xlu0 %880
        %883 = vset.pattern.permute.xlu0 2
        %884 = vperm.xlu0 %883, %v335
        %v885 = vpop.permute.xlu0 %884
        %v887 = vperm.slane %v336, 2
        %v888 = vmul.f32 %v761, %v887
        %v889 = vmul.f32 %v765, %v887
        %v890 = vmul.f32 %v769, %v887
        %v891 = vmul.f32 %v773, %v887
        %v892 = vmul.f32 %v777, %v887
        %v893 = vmul.f32 %v781, %v887
        %v894 = vmul.f32 %v785, %v887
        %v895 = vmul.f32 %v789, %v887
        %v896 = vmul.f32 %v793, %v887
        %v897 = vmul.f32 %v797, %v887
        %v898 = vmul.f32 %v801, %v887
        %v899 = vmul.f32 %v805, %v887
        %v900 = vmul.f32 %v809, %v887
        %v901 = vmul.f32 %v813, %v887
        %v902 = vmul.f32 %v817, %v887
        %v903 = vmul.f32 %v821, %v887
        %v904 = vmul.f32 %v825, %v887
        %v905 = vmul.f32 %v829, %v887
        %v906 = vmul.f32 %v833, %v887
        %v907 = vmul.f32 %v837, %v887
        %v908 = vmul.f32 %v841, %v887
        %v909 = vmul.f32 %v845, %v887
        %v910 = vmul.f32 %v849, %v887
        %v911 = vmul.f32 %v853, %v887
        %v912 = vmul.f32 %v857, %v887
        %v913 = vmul.f32 %v861, %v887
        %v914 = vmul.f32 %v865, %v887
        %v915 = vmul.f32 %v869, %v887
        %v916 = vmul.f32 %v873, %v887
        %v917 = vmul.f32 %v877, %v887
        %v918 = vmul.f32 %v881, %v887
        %v919 = vmul.f32 %v885, %v887
        %v920 = vadd.f32 %v727, %v888
        %v921 = vadd.f32 %v728, %v889
        %v922 = vadd.f32 %v729, %v890
        %v923 = vadd.f32 %v730, %v891
        %v924 = vadd.f32 %v731, %v892
        %v925 = vadd.f32 %v732, %v893
        %v926 = vadd.f32 %v733, %v894
        %v927 = vadd.f32 %v734, %v895
        %v928 = vadd.f32 %v735, %v896
        %v929 = vadd.f32 %v736, %v897
        %v930 = vadd.f32 %v737, %v898
        %v931 = vadd.f32 %v738, %v899
        %v932 = vadd.f32 %v739, %v900
        %v933 = vadd.f32 %v740, %v901
        %v934 = vadd.f32 %v741, %v902
        %v935 = vadd.f32 %v742, %v903
        %v936 = vadd.f32 %v743, %v904
        %v937 = vadd.f32 %v744, %v905
        %v938 = vadd.f32 %v745, %v906
        %v939 = vadd.f32 %v746, %v907
        %v940 = vadd.f32 %v747, %v908
        %v941 = vadd.f32 %v748, %v909
        %v942 = vadd.f32 %v749, %v910
        %v943 = vadd.f32 %v750, %v911
        %v944 = vadd.f32 %v751, %v912
        %v945 = vadd.f32 %v752, %v913
        %v946 = vadd.f32 %v753, %v914
        %v947 = vadd.f32 %v754, %v915
        %v948 = vadd.f32 %v755, %v916
        %v949 = vadd.f32 %v756, %v917
        %v950 = vadd.f32 %v757, %v918
        %v951 = vadd.f32 %v758, %v919
        %952 = vset.pattern.permute.xlu0 3
        %953 = vperm.xlu0 %952, %v304
        %v954 = vpop.permute.xlu0 %953
        %956 = vset.pattern.permute.xlu0 3
        %957 = vperm.xlu0 %956, %v305
        %v958 = vpop.permute.xlu0 %957
        %960 = vset.pattern.permute.xlu0 3
        %961 = vperm.xlu0 %960, %v306
        %v962 = vpop.permute.xlu0 %961
        %964 = vset.pattern.permute.xlu0 3
        %965 = vperm.xlu0 %964, %v307
        %v966 = vpop.permute.xlu0 %965
        %968 = vset.pattern.permute.xlu0 3
        %969 = vperm.xlu0 %968, %v308
        %v970 = vpop.permute.xlu0 %969
        %972 = vset.pattern.permute.xlu0 3
        %973 = vperm.xlu0 %972, %v309
        %v974 = vpop.permute.xlu0 %973
        %976 = vset.pattern.permute.xlu0 3
        %977 = vperm.xlu0 %976, %v310
        %v978 = vpop.permute.xlu0 %977
        %980 = vset.pattern.permute.xlu0 3
        %981 = vperm.xlu0 %980, %v311
        %v982 = vpop.permute.xlu0 %981
        %984 = vset.pattern.permute.xlu0 3
        %985 = vperm.xlu0 %984, %v312
        %v986 = vpop.permute.xlu0 %985
        %988 = vset.pattern.permute.xlu0 3
        %989 = vperm.xlu0 %988, %v313
        %v990 = vpop.permute.xlu0 %989
        %992 = vset.pattern.permute.xlu0 3
        %993 = vperm.xlu0 %992, %v314
        %v994 = vpop.permute.xlu0 %993
        %996 = vset.pattern.permute.xlu0 3
        %997 = vperm.xlu0 %996, %v315
        %v998 = vpop.permute.xlu0 %997
        %1000 = vset.pattern.permute.xlu0 3
        %1001 = vperm.xlu0 %1000, %v316
        %v1002 = vpop.permute.xlu0 %1001
        %1004 = vset.pattern.permute.xlu0 3
        %1005 = vperm.xlu0 %1004, %v317
        %v1006 = vpop.permute.xlu0 %1005
        %1008 = vset.pattern.permute.xlu0 3
        %1009 = vperm.xlu0 %1008, %v318
        %v1010 = vpop.permute.xlu0 %1009
        %1012 = vset.pattern.permute.xlu0 3
        %1013 = vperm.xlu0 %1012, %v319
        %v1014 = vpop.permute.xlu0 %1013
        %1016 = vset.pattern.permute.xlu0 3
        %1017 = vperm.xlu0 %1016, %v320
        %v1018 = vpop.permute.xlu0 %1017
        %1020 = vset.pattern.permute.xlu0 3
        %1021 = vperm.xlu0 %1020, %v321
        %v1022 = vpop.permute.xlu0 %1021
        %1024 = vset.pattern.permute.xlu0 3
        %1025 = vperm.xlu0 %1024, %v322
        %v1026 = vpop.permute.xlu0 %1025
        %1028 = vset.pattern.permute.xlu0 3
        %1029 = vperm.xlu0 %1028, %v323
        %v1030 = vpop.permute.xlu0 %1029
        %1032 = vset.pattern.permute.xlu0 3
        %1033 = vperm.xlu0 %1032, %v324
        %v1034 = vpop.permute.xlu0 %1033
        %1036 = vset.pattern.permute.xlu0 3
        %1037 = vperm.xlu0 %1036, %v325
        %v1038 = vpop.permute.xlu0 %1037
        %1040 = vset.pattern.permute.xlu0 3
        %1041 = vperm.xlu0 %1040, %v326
        %v1042 = vpop.permute.xlu0 %1041
        %1044 = vset.pattern.permute.xlu0 3
        %1045 = vperm.xlu0 %1044, %v327
        %v1046 = vpop.permute.xlu0 %1045
        %1048 = vset.pattern.permute.xlu0 3
        %1049 = vperm.xlu0 %1048, %v328
        %v1050 = vpop.permute.xlu0 %1049
        %1052 = vset.pattern.permute.xlu0 3
        %1053 = vperm.xlu0 %1052, %v329
        %v1054 = vpop.permute.xlu0 %1053
        %1056 = vset.pattern.permute.xlu0 3
        %1057 = vperm.xlu0 %1056, %v330
        %v1058 = vpop.permute.xlu0 %1057
        %1060 = vset.pattern.permute.xlu0 3
        %1061 = vperm.xlu0 %1060, %v331
        %v1062 = vpop.permute.xlu0 %1061
        %1064 = vset.pattern.permute.xlu0 3
        %1065 = vperm.xlu0 %1064, %v332
        %v1066 = vpop.permute.xlu0 %1065
        %1068 = vset.pattern.permute.xlu0 3
        %1069 = vperm.xlu0 %1068, %v333
        %v1070 = vpop.permute.xlu0 %1069
        %1072 = vset.pattern.permute.xlu0 3
        %1073 = vperm.xlu0 %1072, %v334
        %v1074 = vpop.permute.xlu0 %1073
        %1076 = vset.pattern.permute.xlu0 3
        %1077 = vperm.xlu0 %1076, %v335
        %v1078 = vpop.permute.xlu0 %1077
        %v1080 = vperm.slane %v336, 3
        %v1081 = vmul.f32 %v954, %v1080
        %v1082 = vmul.f32 %v958, %v1080
        %v1083 = vmul.f32 %v962, %v1080
        %v1084 = vmul.f32 %v966, %v1080
        %v1085 = vmul.f32 %v970, %v1080
        %v1086 = vmul.f32 %v974, %v1080
        %v1087 = vmul.f32 %v978, %v1080
        %v1088 = vmul.f32 %v982, %v1080
        %v1089 = vmul.f32 %v986, %v1080
        %v1090 = vmul.f32 %v990, %v1080
        %v1091 = vmul.f32 %v994, %v1080
        %v1092 = vmul.f32 %v998, %v1080
        %v1093 = vmul.f32 %v1002, %v1080
        %v1094 = vmul.f32 %v1006, %v1080
        %v1095 = vmul.f32 %v1010, %v1080
        %v1096 = vmul.f32 %v1014, %v1080
        %v1097 = vmul.f32 %v1018, %v1080
        %v1098 = vmul.f32 %v1022, %v1080
        %v1099 = vmul.f32 %v1026, %v1080
        %v1100 = vmul.f32 %v1030, %v1080
        %v1101 = vmul.f32 %v1034, %v1080
        %v1102 = vmul.f32 %v1038, %v1080
        %v1103 = vmul.f32 %v1042, %v1080
        %v1104 = vmul.f32 %v1046, %v1080
        %v1105 = vmul.f32 %v1050, %v1080
        %v1106 = vmul.f32 %v1054, %v1080
        %v1107 = vmul.f32 %v1058, %v1080
        %v1108 = vmul.f32 %v1062, %v1080
        %v1109 = vmul.f32 %v1066, %v1080
        %v1110 = vmul.f32 %v1070, %v1080
        %v1111 = vmul.f32 %v1074, %v1080
        %v1112 = vmul.f32 %v1078, %v1080
        %v1113 = vadd.f32 %v920, %v1081
        %v1114 = vadd.f32 %v921, %v1082
        %v1115 = vadd.f32 %v922, %v1083
        %v1116 = vadd.f32 %v923, %v1084
        %v1117 = vadd.f32 %v924, %v1085
        %v1118 = vadd.f32 %v925, %v1086
        %v1119 = vadd.f32 %v926, %v1087
        %v1120 = vadd.f32 %v927, %v1088
        %v1121 = vadd.f32 %v928, %v1089
        %v1122 = vadd.f32 %v929, %v1090
        %v1123 = vadd.f32 %v930, %v1091
        %v1124 = vadd.f32 %v931, %v1092
        %v1125 = vadd.f32 %v932, %v1093
        %v1126 = vadd.f32 %v933, %v1094
        %v1127 = vadd.f32 %v934, %v1095
        %v1128 = vadd.f32 %v935, %v1096
        %v1129 = vadd.f32 %v936, %v1097
        %v1130 = vadd.f32 %v937, %v1098
        %v1131 = vadd.f32 %v938, %v1099
        %v1132 = vadd.f32 %v939, %v1100
        %v1133 = vadd.f32 %v940, %v1101
        %v1134 = vadd.f32 %v941, %v1102
        %v1135 = vadd.f32 %v942, %v1103
        %v1136 = vadd.f32 %v943, %v1104
        %v1137 = vadd.f32 %v944, %v1105
        %v1138 = vadd.f32 %v945, %v1106
        %v1139 = vadd.f32 %v946, %v1107
        %v1140 = vadd.f32 %v947, %v1108
        %v1141 = vadd.f32 %v948, %v1109
        %v1142 = vadd.f32 %v949, %v1110
        %v1143 = vadd.f32 %v950, %v1111
        %v1144 = vadd.f32 %v951, %v1112
        %v1145 = vmax.f32 %v1113, 0.0
        %v1146 = vmax.f32 %v1114, 0.0
        %v1147 = vmax.f32 %v1115, 0.0
        %v1148 = vmax.f32 %v1116, 0.0
        %v1149 = vmax.f32 %v1117, 0.0
        %v1150 = vmax.f32 %v1118, 0.0
        %v1151 = vmax.f32 %v1119, 0.0
        %v1152 = vmax.f32 %v1120, 0.0
        %v1153 = vmax.f32 %v1121, 0.0
        %v1154 = vmax.f32 %v1122, 0.0
        %v1155 = vmax.f32 %v1123, 0.0
        %v1156 = vmax.f32 %v1124, 0.0
        %v1157 = vmax.f32 %v1125, 0.0
        %v1158 = vmax.f32 %v1126, 0.0
        %v1159 = vmax.f32 %v1127, 0.0
        %v1160 = vmax.f32 %v1128, 0.0
        %v1161 = vmax.f32 %v1129, 0.0
        %v1162 = vmax.f32 %v1130, 0.0
        %v1163 = vmax.f32 %v1131, 0.0
        %v1164 = vmax.f32 %v1132, 0.0
        %v1165 = vmax.f32 %v1133, 0.0
        %v1166 = vmax.f32 %v1134, 0.0
        %v1167 = vmax.f32 %v1135, 0.0
        %v1168 = vmax.f32 %v1136, 0.0
        %v1169 = vmax.f32 %v1137, 0.0
        %v1170 = vmax.f32 %v1138, 0.0
        %v1171 = vmax.f32 %v1139, 0.0
        %v1172 = vmax.f32 %v1140, 0.0
        %v1173 = vmax.f32 %v1141, 0.0
        %v1174 = vmax.f32 %v1142, 0.0
        %v1175 = vmax.f32 %v1143, 0.0
        %v1176 = vmax.f32 %v1144, 0.0
        %v1177 = vpack.c.bf16 %v1146, %v1145
        %v1178 = vpack.c.bf16 %v1148, %v1147
        %v1179 = vpack.c.bf16 %v1150, %v1149
        %v1180 = vpack.c.bf16 %v1152, %v1151
        %v1181 = vpack.c.bf16 %v1154, %v1153
        %v1182 = vpack.c.bf16 %v1156, %v1155
        %v1183 = vpack.c.bf16 %v1158, %v1157
        %v1184 = vpack.c.bf16 %v1160, %v1159
        %v1185 = vpack.c.bf16 %v1162, %v1161
        %v1186 = vpack.c.bf16 %v1164, %v1163
        %v1187 = vpack.c.bf16 %v1166, %v1165
        %v1188 = vpack.c.bf16 %v1168, %v1167
        %v1189 = vpack.c.bf16 %v1170, %v1169
        %v1190 = vpack.c.bf16 %v1172, %v1171
        %v1191 = vpack.c.bf16 %v1174, %v1173
        %v1192 = vpack.c.bf16 %v1176, %v1175
        %v1193 = vld [vmem:[%s3] sm:$0xff]
        %v1194 = vld [vmem:[%s3 + $0x8] sm:$0xff]
        %v1195 = vld [vmem:[%s3 + $0x10] sm:$0xff]
        %v1196 = vld [vmem:[%s3 + $0x18] sm:$0xff]
        %v1197 = vld [vmem:[%s3 + $0x20] sm:$0xff]
        %v1198 = vld [vmem:[%s3 + $0x28] sm:$0xff]
        %v1199 = vld [vmem:[%s3 + $0x30] sm:$0xff]
        %v1200 = vld [vmem:[%s3 + $0x38] sm:$0xff]
        %v1201 = vld [vmem:[%s3 + $0x40] sm:$0xff]
        %v1202 = vld [vmem:[%s3 + $0x48] sm:$0xff]
        %v1203 = vld [vmem:[%s3 + $0x50] sm:$0xff]
        %v1204 = vld [vmem:[%s3 + $0x58] sm:$0xff]
        %v1205 = vld [vmem:[%s3 + $0x60] sm:$0xff]
        %v1206 = vld [vmem:[%s3 + $0x68] sm:$0xff]
        %v1207 = vld [vmem:[%s3 + $0x70] sm:$0xff]
        %v1208 = vld [vmem:[%s3 + $0x78] sm:$0xff]
        %v1209 = vld [vmem:[%s4] sm:$0x3]
        %v1211 = vperm.slane %v1209, 0
        %v1212 = vperm.slane %v1209, 1
        %v1231 = vunpack.c.l.b16 %v1193
        %v1232 = vunpack.c.h.b16 %v1193
        %v1233 = vunpack.c.l.b16 %v1194
        %v1234 = vunpack.c.h.b16 %v1194
        %v1235 = vunpack.c.l.b16 %v1195
        %v1236 = vunpack.c.h.b16 %v1195
        %v1237 = vunpack.c.l.b16 %v1196
        %v1238 = vunpack.c.h.b16 %v1196
        %v1239 = vunpack.c.l.b16 %v1197
        %v1240 = vunpack.c.h.b16 %v1197
        %v1241 = vunpack.c.l.b16 %v1198
        %v1242 = vunpack.c.h.b16 %v1198
        %v1243 = vunpack.c.l.b16 %v1199
        %v1244 = vunpack.c.h.b16 %v1199
        %v1245 = vunpack.c.l.b16 %v1200
        %v1246 = vunpack.c.h.b16 %v1200
        %v1247 = vunpack.c.l.b16 %v1201
        %v1248 = vunpack.c.h.b16 %v1201
        %v1249 = vunpack.c.l.b16 %v1202
        %v1250 = vunpack.c.h.b16 %v1202
        %v1251 = vunpack.c.l.b16 %v1203
        %v1252 = vunpack.c.h.b16 %v1203
        %v1253 = vunpack.c.l.b16 %v1204
        %v1254 = vunpack.c.h.b16 %v1204
        %v1255 = vunpack.c.l.b16 %v1205
        %v1256 = vunpack.c.h.b16 %v1205
        %v1257 = vunpack.c.l.b16 %v1206
        %v1258 = vunpack.c.h.b16 %v1206
        %v1259 = vunpack.c.l.b16 %v1207
        %v1260 = vunpack.c.h.b16 %v1207
        %v1261 = vunpack.c.l.b16 %v1208
        %v1262 = vunpack.c.h.b16 %v1208
        %v1263 = vpack.c.b16 %v1233, %v1231
        %v1264 = vpack.c.b16 %v1234, %v1232
        %v1265 = vpack.c.b16 %v1237, %v1235
        %v1266 = vpack.c.b16 %v1238, %v1236
        %v1267 = vpack.c.b16 %v1241, %v1239
        %v1268 = vpack.c.b16 %v1242, %v1240
        %v1269 = vpack.c.b16 %v1245, %v1243
        %v1270 = vpack.c.b16 %v1246, %v1244
        %v1271 = vpack.c.b16 %v1249, %v1247
        %v1272 = vpack.c.b16 %v1250, %v1248
        %v1273 = vpack.c.b16 %v1253, %v1251
        %v1274 = vpack.c.b16 %v1254, %v1252
        %v1275 = vpack.c.b16 %v1257, %v1255
        %v1276 = vpack.c.b16 %v1258, %v1256
        %v1277 = vpack.c.b16 %v1261, %v1259
        %v1278 = vpack.c.b16 %v1262, %v1260
        %1295 = vmatpush.bf16.msra.mxu0 %v1277
        %1296 = vmatpush.bf16.msra.mxu0 %v1275
        %1297 = vmatpush.bf16.msra.mxu0 %v1273
        %1298 = vmatpush.bf16.msra.mxu0 %v1271
        %1299 = vmatpush.bf16.msra.mxu0 %v1269
        %1300 = vmatpush.bf16.msra.mxu0 %v1267
        %1301 = vmatpush.bf16.msra.mxu0 %v1265
        %1302 = vmatpush.bf16.msra.mxu0 %v1263
        %1303 = vmatmul.bf16.gmra.mxu0 %v1177
        %v1304 = vpop.f32.mrf.mxu0
        %v1305 = vadd.f32 %v1211, %v1304
        %v1306 = vpop.f32.mrf.mxu0
        %v1307 = vadd.f32 %v1211, %v1306
        %1308 = vmatmul.bf16.gmra.mxu0 %v1178
        %v1309 = vpop.f32.mrf.mxu0
        %v1310 = vadd.f32 %v1211, %v1309
        %v1311 = vpop.f32.mrf.mxu0
        %v1312 = vadd.f32 %v1211, %v1311
        %1313 = vmatmul.bf16.gmra.mxu0 %v1179
        %v1314 = vpop.f32.mrf.mxu0
        %v1315 = vadd.f32 %v1211, %v1314
        %v1316 = vpop.f32.mrf.mxu0
        %v1317 = vadd.f32 %v1211, %v1316
        %1318 = vmatmul.bf16.gmra.mxu0 %v1180
        %v1319 = vpop.f32.mrf.mxu0
        %v1320 = vadd.f32 %v1211, %v1319
        %v1321 = vpop.f32.mrf.mxu0
        %v1322 = vadd.f32 %v1211, %v1321
        %1323 = vmatmul.bf16.gmra.mxu0 %v1181
        %v1324 = vpop.f32.mrf.mxu0
        %v1325 = vadd.f32 %v1211, %v1324
        %v1326 = vpop.f32.mrf.mxu0
        %v1327 = vadd.f32 %v1211, %v1326
        %1328 = vmatmul.bf16.gmra.mxu0 %v1182
        %v1329 = vpop.f32.mrf.mxu0
        %v1330 = vadd.f32 %v1211, %v1329
        %v1331 = vpop.f32.mrf.mxu0
        %v1332 = vadd.f32 %v1211, %v1331
        %1333 = vmatmul.bf16.gmra.mxu0 %v1183
        %v1334 = vpop.f32.mrf.mxu0
        %v1335 = vadd.f32 %v1211, %v1334
        %v1336 = vpop.f32.mrf.mxu0
        %v1337 = vadd.f32 %v1211, %v1336
        %1338 = vmatmul.bf16.gmra.mxu0 %v1184
        %v1339 = vpop.f32.mrf.mxu0
        %v1340 = vadd.f32 %v1211, %v1339
        %v1341 = vpop.f32.mrf.mxu0
        %v1342 = vadd.f32 %v1211, %v1341
        %1343 = vmatmul.bf16.gmra.mxu0 %v1185
        %v1344 = vpop.f32.mrf.mxu0
        %v1345 = vadd.f32 %v1211, %v1344
        %v1346 = vpop.f32.mrf.mxu0
        %v1347 = vadd.f32 %v1211, %v1346
        %1348 = vmatmul.bf16.gmra.mxu0 %v1186
        %v1349 = vpop.f32.mrf.mxu0
        %v1350 = vadd.f32 %v1211, %v1349
        %v1351 = vpop.f32.mrf.mxu0
        %v1352 = vadd.f32 %v1211, %v1351
        %1353 = vmatmul.bf16.gmra.mxu0 %v1187
        %v1354 = vpop.f32.mrf.mxu0
        %v1355 = vadd.f32 %v1211, %v1354
        %v1356 = vpop.f32.mrf.mxu0
        %v1357 = vadd.f32 %v1211, %v1356
        %1358 = vmatmul.bf16.gmra.mxu0 %v1188
        %v1359 = vpop.f32.mrf.mxu0
        %v1360 = vadd.f32 %v1211, %v1359
        %v1361 = vpop.f32.mrf.mxu0
        %v1362 = vadd.f32 %v1211, %v1361
        %1363 = vmatmul.bf16.gmra.mxu0 %v1189
        %v1364 = vpop.f32.mrf.mxu0
        %v1365 = vadd.f32 %v1211, %v1364
        %v1366 = vpop.f32.mrf.mxu0
        %v1367 = vadd.f32 %v1211, %v1366
        %1368 = vmatmul.bf16.gmra.mxu0 %v1190
        %v1369 = vpop.f32.mrf.mxu0
        %v1370 = vadd.f32 %v1211, %v1369
        %v1371 = vpop.f32.mrf.mxu0
        %v1372 = vadd.f32 %v1211, %v1371
        %1373 = vmatmul.bf16.gmra.mxu0 %v1191
        %v1374 = vpop.f32.mrf.mxu0
        %v1375 = vadd.f32 %v1211, %v1374
        %v1376 = vpop.f32.mrf.mxu0
        %v1377 = vadd.f32 %v1211, %v1376
        %1378 = vmatmul.bf16.gmra.mxu0 %v1192
        %v1379 = vpop.f32.mrf.mxu0
        %v1380 = vadd.f32 %v1211, %v1379
        %v1381 = vpop.f32.mrf.mxu0
        %v1382 = vadd.f32 %v1211, %v1381
        %1383 = vdwg.mxu0
        %1384 = vmatpush.bf16.msra.mxu0 %v1278
        %1385 = vmatpush.bf16.msra.mxu0 %v1276
        %1386 = vmatpush.bf16.msra.mxu0 %v1274
        %1387 = vmatpush.bf16.msra.mxu0 %v1272
        %1388 = vmatpush.bf16.msra.mxu0 %v1270
        %1389 = vmatpush.bf16.msra.mxu0 %v1268
        %1390 = vmatpush.bf16.msra.mxu0 %v1266
        %1391 = vmatpush.bf16.msra.mxu0 %v1264
        %1392 = vmatmul.bf16.gmra.mxu0 %v1177
        %v1393 = vpop.f32.mrf.mxu0
        %v1394 = vadd.f32 %v1212, %v1393
        %v1395 = vpop.f32.mrf.mxu0
        %v1396 = vadd.f32 %v1212, %v1395
        %1397 = vmatmul.bf16.gmra.mxu0 %v1178
        %v1398 = vpop.f32.mrf.mxu0
        %v1399 = vadd.f32 %v1212, %v1398
        %v1400 = vpop.f32.mrf.mxu0
        %v1401 = vadd.f32 %v1212, %v1400
        %1402 = vmatmul.bf16.gmra.mxu0 %v1179
        %v1403 = vpop.f32.mrf.mxu0
        %v1404 = vadd.f32 %v1212, %v1403
        %v1405 = vpop.f32.mrf.mxu0
        %v1406 = vadd.f32 %v1212, %v1405
        %1407 = vmatmul.bf16.gmra.mxu0 %v1180
        %v1408 = vpop.f32.mrf.mxu0
        %v1409 = vadd.f32 %v1212, %v1408
        %v1410 = vpop.f32.mrf.mxu0
        %v1411 = vadd.f32 %v1212, %v1410
        %1412 = vmatmul.bf16.gmra.mxu0 %v1181
        %v1413 = vpop.f32.mrf.mxu0
        %v1414 = vadd.f32 %v1212, %v1413
        %v1415 = vpop.f32.mrf.mxu0
        %v1416 = vadd.f32 %v1212, %v1415
        %1417 = vmatmul.bf16.gmra.mxu0 %v1182
        %v1418 = vpop.f32.mrf.mxu0
        %v1419 = vadd.f32 %v1212, %v1418
        %v1420 = vpop.f32.mrf.mxu0
        %v1421 = vadd.f32 %v1212, %v1420
        %1422 = vmatmul.bf16.gmra.mxu0 %v1183
        %v1423 = vpop.f32.mrf.mxu0
        %v1424 = vadd.f32 %v1212, %v1423
        %v1425 = vpop.f32.mrf.mxu0
        %v1426 = vadd.f32 %v1212, %v1425
        %1427 = vmatmul.bf16.gmra.mxu0 %v1184
        %v1428 = vpop.f32.mrf.mxu0
        %v1429 = vadd.f32 %v1212, %v1428
        %v1430 = vpop.f32.mrf.mxu0
        %v1431 = vadd.f32 %v1212, %v1430
        %1432 = vmatmul.bf16.gmra.mxu0 %v1185
        %v1433 = vpop.f32.mrf.mxu0
        %v1434 = vadd.f32 %v1212, %v1433
        %v1435 = vpop.f32.mrf.mxu0
        %v1436 = vadd.f32 %v1212, %v1435
        %1437 = vmatmul.bf16.gmra.mxu0 %v1186
        %v1438 = vpop.f32.mrf.mxu0
        %v1439 = vadd.f32 %v1212, %v1438
        %v1440 = vpop.f32.mrf.mxu0
        %v1441 = vadd.f32 %v1212, %v1440
        %1442 = vmatmul.bf16.gmra.mxu0 %v1187
        %v1443 = vpop.f32.mrf.mxu0
        %v1444 = vadd.f32 %v1212, %v1443
        %v1445 = vpop.f32.mrf.mxu0
        %v1446 = vadd.f32 %v1212, %v1445
        %1447 = vmatmul.bf16.gmra.mxu0 %v1188
        %v1448 = vpop.f32.mrf.mxu0
        %v1449 = vadd.f32 %v1212, %v1448
        %v1450 = vpop.f32.mrf.mxu0
        %v1451 = vadd.f32 %v1212, %v1450
        %1452 = vmatmul.bf16.gmra.mxu0 %v1189
        %v1453 = vpop.f32.mrf.mxu0
        %v1454 = vadd.f32 %v1212, %v1453
        %v1455 = vpop.f32.mrf.mxu0
        %v1456 = vadd.f32 %v1212, %v1455
        %1457 = vmatmul.bf16.gmra.mxu0 %v1190
        %v1458 = vpop.f32.mrf.mxu0
        %v1459 = vadd.f32 %v1212, %v1458
        %v1460 = vpop.f32.mrf.mxu0
        %v1461 = vadd.f32 %v1212, %v1460
        %1462 = vmatmul.bf16.gmra.mxu0 %v1191
        %v1463 = vpop.f32.mrf.mxu0
        %v1464 = vadd.f32 %v1212, %v1463
        %v1465 = vpop.f32.mrf.mxu0
        %v1466 = vadd.f32 %v1212, %v1465
        %1467 = vmatmul.bf16.gmra.mxu0 %v1192
        %v1468 = vpop.f32.mrf.mxu0
        %v1469 = vadd.f32 %v1212, %v1468
        %v1470 = vpop.f32.mrf.mxu0
        %v1471 = vadd.f32 %v1212, %v1470
        %1472 = vdwg.mxu0
        %v1473 = vmax.f32 %v1305, 0.0
        %v1474 = vmax.f32 %v1394, 0.0
        %v1475 = vmax.f32 %v1307, 0.0
        %v1476 = vmax.f32 %v1396, 0.0
        %v1477 = vmax.f32 %v1310, 0.0
        %v1478 = vmax.f32 %v1399, 0.0
        %v1479 = vmax.f32 %v1312, 0.0
        %v1480 = vmax.f32 %v1401, 0.0
        %v1481 = vmax.f32 %v1315, 0.0
        %v1482 = vmax.f32 %v1404, 0.0
        %v1483 = vmax.f32 %v1317, 0.0
        %v1484 = vmax.f32 %v1406, 0.0
        %v1485 = vmax.f32 %v1320, 0.0
        %v1486 = vmax.f32 %v1409, 0.0
        %v1487 = vmax.f32 %v1322, 0.0
        %v1488 = vmax.f32 %v1411, 0.0
        %v1489 = vmax.f32 %v1325, 0.0
        %v1490 = vmax.f32 %v1414, 0.0
        %v1491 = vmax.f32 %v1327, 0.0
        %v1492 = vmax.f32 %v1416, 0.0
        %v1493 = vmax.f32 %v1330, 0.0
        %v1494 = vmax.f32 %v1419, 0.0
        %v1495 = vmax.f32 %v1332, 0.0
        %v1496 = vmax.f32 %v1421, 0.0
        %v1497 = vmax.f32 %v1335, 0.0
        %v1498 = vmax.f32 %v1424, 0.0
        %v1499 = vmax.f32 %v1337, 0.0
        %v1500 = vmax.f32 %v1426, 0.0
        %v1501 = vmax.f32 %v1340, 0.0
        %v1502 = vmax.f32 %v1429, 0.0
        %v1503 = vmax.f32 %v1342, 0.0
        %v1504 = vmax.f32 %v1431, 0.0
        %v1505 = vmax.f32 %v1345, 0.0
        %v1506 = vmax.f32 %v1434, 0.0
        %v1507 = vmax.f32 %v1347, 0.0
        %v1508 = vmax.f32 %v1436, 0.0
        %v1509 = vmax.f32 %v1350, 0.0
        %v1510 = vmax.f32 %v1439, 0.0
        %v1511 = vmax.f32 %v1352, 0.0
        %v1512 = vmax.f32 %v1441, 0.0
        %v1513 = vmax.f32 %v1355, 0.0
        %v1514 = vmax.f32 %v1444, 0.0
        %v1515 = vmax.f32 %v1357, 0.0
        %v1516 = vmax.f32 %v1446, 0.0
        %v1517 = vmax.f32 %v1360, 0.0
        %v1518 = vmax.f32 %v1449, 0.0
        %v1519 = vmax.f32 %v1362, 0.0
        %v1520 = vmax.f32 %v1451, 0.0
        %v1521 = vmax.f32 %v1365, 0.0
        %v1522 = vmax.f32 %v1454, 0.0
        %v1523 = vmax.f32 %v1367, 0.0
        %v1524 = vmax.f32 %v1456, 0.0
        %v1525 = vmax.f32 %v1370, 0.0
        %v1526 = vmax.f32 %v1459, 0.0
        %v1527 = vmax.f32 %v1372, 0.0
        %v1528 = vmax.f32 %v1461, 0.0
        %v1529 = vmax.f32 %v1375, 0.0
        %v1530 = vmax.f32 %v1464, 0.0
        %v1531 = vmax.f32 %v1377, 0.0
        %v1532 = vmax.f32 %v1466, 0.0
        %v1533 = vmax.f32 %v1380, 0.0
        %v1534 = vmax.f32 %v1469, 0.0
        %v1535 = vmax.f32 %v1382, 0.0
        %v1536 = vmax.f32 %v1471, 0.0
        %v1537 = vpack.c.bf16 %v1475, %v1473
        %v1538 = vpack.c.bf16 %v1476, %v1474
        %v1539 = vpack.c.bf16 %v1479, %v1477
        %v1540 = vpack.c.bf16 %v1480, %v1478
        %v1541 = vpack.c.bf16 %v1483, %v1481
        %v1542 = vpack.c.bf16 %v1484, %v1482
        %v1543 = vpack.c.bf16 %v1487, %v1485
        %v1544 = vpack.c.bf16 %v1488, %v1486
        %v1545 = vpack.c.bf16 %v1491, %v1489
        %v1546 = vpack.c.bf16 %v1492, %v1490
        %v1547 = vpack.c.bf16 %v1495, %v1493
        %v1548 = vpack.c.bf16 %v1496, %v1494
        %v1549 = vpack.c.bf16 %v1499, %v1497
        %v1550 = vpack.c.bf16 %v1500, %v1498
        %v1551 = vpack.c.bf16 %v1503, %v1501
        %v1552 = vpack.c.bf16 %v1504, %v1502
        %v1553 = vpack.c.bf16 %v1507, %v1505
        %v1554 = vpack.c.bf16 %v1508, %v1506
        %v1555 = vpack.c.bf16 %v1511, %v1509
        %v1556 = vpack.c.bf16 %v1512, %v1510
        %v1557 = vpack.c.bf16 %v1515, %v1513
        %v1558 = vpack.c.bf16 %v1516, %v1514
        %v1559 = vpack.c.bf16 %v1519, %v1517
        %v1560 = vpack.c.bf16 %v1520, %v1518
        %v1561 = vpack.c.bf16 %v1523, %v1521
        %v1562 = vpack.c.bf16 %v1524, %v1522
        %v1563 = vpack.c.bf16 %v1527, %v1525
        %v1564 = vpack.c.bf16 %v1528, %v1526
        %v1565 = vpack.c.bf16 %v1531, %v1529
        %v1566 = vpack.c.bf16 %v1532, %v1530
        %v1567 = vpack.c.bf16 %v1535, %v1533
        %v1568 = vpack.c.bf16 %v1536, %v1534
        %v1569 = vld [vmem:[%s5] sm:$0xf]
        %v1570 = vld [vmem:[%s5 + $0x4] sm:$0xf]
        %v1571 = vld [vmem:[%s5 + $0x8] sm:$0xf]
        %v1572 = vld [vmem:[%s5 + $0xc] sm:$0xf]
        %v1573 = vld [vmem:[%s5 + $0x10] sm:$0xf]
        %v1574 = vld [vmem:[%s5 + $0x14] sm:$0xf]
        %v1575 = vld [vmem:[%s5 + $0x18] sm:$0xf]
        %v1576 = vld [vmem:[%s5 + $0x1c] sm:$0xf]
        %v1577 = vld [vmem:[%s5 + $0x20] sm:$0xf]
        %v1578 = vld [vmem:[%s5 + $0x24] sm:$0xf]
        %v1579 = vld [vmem:[%s5 + $0x28] sm:$0xf]
        %v1580 = vld [vmem:[%s5 + $0x2c] sm:$0xf]
        %v1581 = vld [vmem:[%s5 + $0x30] sm:$0xf]
        %v1582 = vld [vmem:[%s5 + $0x34] sm:$0xf]
        %v1583 = vld [vmem:[%s5 + $0x38] sm:$0xf]
        %v1584 = vld [vmem:[%s5 + $0x3c] sm:$0xf]
        %v1585 = vld [vmem:[%s5 + $0x40] sm:$0xf]
        %v1586 = vld [vmem:[%s5 + $0x44] sm:$0xf]
        %v1587 = vld [vmem:[%s5 + $0x48] sm:$0xf]
        %v1588 = vld [vmem:[%s5 + $0x4c] sm:$0xf]
        %v1589 = vld [vmem:[%s5 + $0x50] sm:$0xf]
        %v1590 = vld [vmem:[%s5 + $0x54] sm:$0xf]
        %v1591 = vld [vmem:[%s5 + $0x58] sm:$0xf]
        %v1592 = vld [vmem:[%s5 + $0x5c] sm:$0xf]
        %v1593 = vld [vmem:[%s5 + $0x60] sm:$0xf]
        %v1594 = vld [vmem:[%s5 + $0x64] sm:$0xf]
        %v1595 = vld [vmem:[%s5 + $0x68] sm:$0xf]
        %v1596 = vld [vmem:[%s5 + $0x6c] sm:$0xf]
        %v1597 = vld [vmem:[%s5 + $0x70] sm:$0xf]
        %v1598 = vld [vmem:[%s5 + $0x74] sm:$0xf]
        %v1599 = vld [vmem:[%s5 + $0x78] sm:$0xf]
        %v1600 = vld [vmem:[%s5 + $0x7c] sm:$0xf]
        %v1601 = vld [vmem:[%s6] sm:$0x1]
        %v1603 = vperm.slane %v1601, 0
        %v1637 = vunpack.c.l.b16 %v1569
        %v1638 = vunpack.c.l.b16 %v1570
        %v1639 = vunpack.c.l.b16 %v1571
        %v1640 = vunpack.c.l.b16 %v1572
        %v1641 = vunpack.c.l.b16 %v1573
        %v1642 = vunpack.c.l.b16 %v1574
        %v1643 = vunpack.c.l.b16 %v1575
        %v1644 = vunpack.c.l.b16 %v1576
        %v1645 = vunpack.c.l.b16 %v1577
        %v1646 = vunpack.c.l.b16 %v1578
        %v1647 = vunpack.c.l.b16 %v1579
        %v1648 = vunpack.c.l.b16 %v1580
        %v1649 = vunpack.c.l.b16 %v1581
        %v1650 = vunpack.c.l.b16 %v1582
        %v1651 = vunpack.c.l.b16 %v1583
        %v1652 = vunpack.c.l.b16 %v1584
        %v1653 = vunpack.c.l.b16 %v1585
        %v1654 = vunpack.c.l.b16 %v1586
        %v1655 = vunpack.c.l.b16 %v1587
        %v1656 = vunpack.c.l.b16 %v1588
        %v1657 = vunpack.c.l.b16 %v1589
        %v1658 = vunpack.c.l.b16 %v1590
        %v1659 = vunpack.c.l.b16 %v1591
        %v1660 = vunpack.c.l.b16 %v1592
        %v1661 = vunpack.c.l.b16 %v1593
        %v1662 = vunpack.c.l.b16 %v1594
        %v1663 = vunpack.c.l.b16 %v1595
        %v1664 = vunpack.c.l.b16 %v1596
        %v1665 = vunpack.c.l.b16 %v1597
        %v1666 = vunpack.c.l.b16 %v1598
        %v1667 = vunpack.c.l.b16 %v1599
        %v1668 = vunpack.c.l.b16 %v1600
        %v1669 = vpack.c.b16 %v1638, %v1637
        %v1670 = vpack.c.b16 %v1640, %v1639
        %v1671 = vpack.c.b16 %v1642, %v1641
        %v1672 = vpack.c.b16 %v1644, %v1643
        %v1673 = vpack.c.b16 %v1646, %v1645
        %v1674 = vpack.c.b16 %v1648, %v1647
        %v1675 = vpack.c.b16 %v1650, %v1649
        %v1676 = vpack.c.b16 %v1652, %v1651
        %v1677 = vpack.c.b16 %v1654, %v1653
        %v1678 = vpack.c.b16 %v1656, %v1655
        %v1679 = vpack.c.b16 %v1658, %v1657
        %v1680 = vpack.c.b16 %v1660, %v1659
        %v1681 = vpack.c.b16 %v1662, %v1661
        %v1682 = vpack.c.b16 %v1664, %v1663
        %v1683 = vpack.c.b16 %v1666, %v1665
        %v1684 = vpack.c.b16 %v1668, %v1667
        %1701 = vmatpush.bf16.msra.mxu0 %v1676
        %1702 = vmatpush.bf16.msra.mxu0 %v1675
        %1703 = vmatpush.bf16.msra.mxu0 %v1674
        %1704 = vmatpush.bf16.msra.mxu0 %v1673
        %1705 = vmatpush.bf16.msra.mxu0 %v1672
        %1706 = vmatpush.bf16.msra.mxu0 %v1671
        %1707 = vmatpush.bf16.msra.mxu0 %v1670
        %1708 = vmatpush.bf16.msra.mxu0 %v1669
        %1709 = vmatmul.bf16.gmra.mxu0 %v1537
        %v1710 = vpop.f32.mrf.mxu0
        %v1711 = vadd.f32 %v1603, %v1710
        %v1712 = vpop.f32.mrf.mxu0
        %v1713 = vadd.f32 %v1603, %v1712
        %1714 = vmatmul.bf16.gmra.mxu0 %v1539
        %v1715 = vpop.f32.mrf.mxu0
        %v1716 = vadd.f32 %v1603, %v1715
        %v1717 = vpop.f32.mrf.mxu0
        %v1718 = vadd.f32 %v1603, %v1717
        %1719 = vmatmul.bf16.gmra.mxu0 %v1541
        %v1720 = vpop.f32.mrf.mxu0
        %v1721 = vadd.f32 %v1603, %v1720
        %v1722 = vpop.f32.mrf.mxu0
        %v1723 = vadd.f32 %v1603, %v1722
        %1724 = vmatmul.bf16.gmra.mxu0 %v1543
        %v1725 = vpop.f32.mrf.mxu0
        %v1726 = vadd.f32 %v1603, %v1725
        %v1727 = vpop.f32.mrf.mxu0
        %v1728 = vadd.f32 %v1603, %v1727
        %1729 = vmatmul.bf16.gmra.mxu0 %v1545
        %v1730 = vpop.f32.mrf.mxu0
        %v1731 = vadd.f32 %v1603, %v1730
        %v1732 = vpop.f32.mrf.mxu0
        %v1733 = vadd.f32 %v1603, %v1732
        %1734 = vmatmul.bf16.gmra.mxu0 %v1547
        %v1735 = vpop.f32.mrf.mxu0
        %v1736 = vadd.f32 %v1603, %v1735
        %v1737 = vpop.f32.mrf.mxu0
        %v1738 = vadd.f32 %v1603, %v1737
        %1739 = vmatmul.bf16.gmra.mxu0 %v1549
        %v1740 = vpop.f32.mrf.mxu0
        %v1741 = vadd.f32 %v1603, %v1740
        %v1742 = vpop.f32.mrf.mxu0
        %v1743 = vadd.f32 %v1603, %v1742
        %1744 = vmatmul.bf16.gmra.mxu0 %v1551
        %v1745 = vpop.f32.mrf.mxu0
        %v1746 = vadd.f32 %v1603, %v1745
        %v1747 = vpop.f32.mrf.mxu0
        %v1748 = vadd.f32 %v1603, %v1747
        %1749 = vmatmul.bf16.gmra.mxu0 %v1553
        %v1750 = vpop.f32.mrf.mxu0
        %v1751 = vadd.f32 %v1603, %v1750
        %v1752 = vpop.f32.mrf.mxu0
        %v1753 = vadd.f32 %v1603, %v1752
        %1754 = vmatmul.bf16.gmra.mxu0 %v1555
        %v1755 = vpop.f32.mrf.mxu0
        %v1756 = vadd.f32 %v1603, %v1755
        %v1757 = vpop.f32.mrf.mxu0
        %v1758 = vadd.f32 %v1603, %v1757
        %1759 = vmatmul.bf16.gmra.mxu0 %v1557
        %v1760 = vpop.f32.mrf.mxu0
        %v1761 = vadd.f32 %v1603, %v1760
        %v1762 = vpop.f32.mrf.mxu0
        %v1763 = vadd.f32 %v1603, %v1762
        %1764 = vmatmul.bf16.gmra.mxu0 %v1559
        %v1765 = vpop.f32.mrf.mxu0
        %v1766 = vadd.f32 %v1603, %v1765
        %v1767 = vpop.f32.mrf.mxu0
        %v1768 = vadd.f32 %v1603, %v1767
        %1769 = vmatmul.bf16.gmra.mxu0 %v1561
        %v1770 = vpop.f32.mrf.mxu0
        %v1771 = vadd.f32 %v1603, %v1770
        %v1772 = vpop.f32.mrf.mxu0
        %v1773 = vadd.f32 %v1603, %v1772
        %1774 = vmatmul.bf16.gmra.mxu0 %v1563
        %v1775 = vpop.f32.mrf.mxu0
        %v1776 = vadd.f32 %v1603, %v1775
        %v1777 = vpop.f32.mrf.mxu0
        %v1778 = vadd.f32 %v1603, %v1777
        %1779 = vmatmul.bf16.gmra.mxu0 %v1565
        %v1780 = vpop.f32.mrf.mxu0
        %v1781 = vadd.f32 %v1603, %v1780
        %v1782 = vpop.f32.mrf.mxu0
        %v1783 = vadd.f32 %v1603, %v1782
        %1784 = vmatmul.bf16.gmra.mxu0 %v1567
        %v1785 = vpop.f32.mrf.mxu0
        %v1786 = vadd.f32 %v1603, %v1785
        %v1787 = vpop.f32.mrf.mxu0
        %v1788 = vadd.f32 %v1603, %v1787
        %1789 = vdwg.mxu0
        %1790 = vmatpush.bf16.msra.mxu0 %v1684
        %1791 = vmatpush.bf16.msra.mxu0 %v1683
        %1792 = vmatpush.bf16.msra.mxu0 %v1682
        %1793 = vmatpush.bf16.msra.mxu0 %v1681
        %1794 = vmatpush.bf16.msra.mxu0 %v1680
        %1795 = vmatpush.bf16.msra.mxu0 %v1679
        %1796 = vmatpush.bf16.msra.mxu0 %v1678
        %1797 = vmatpush.bf16.msra.mxu0 %v1677
        %1798 = vmatmul.bf16.gmra.mxu0 %v1538
        %v1799 = vpop.f32.mrf.mxu0
        %v1800 = vadd.f32 %v1711, %v1799
        %v1801 = vpop.f32.mrf.mxu0
        %v1802 = vadd.f32 %v1713, %v1801
        %1803 = vmatmul.bf16.gmra.mxu0 %v1540
        %v1804 = vpop.f32.mrf.mxu0
        %v1805 = vadd.f32 %v1716, %v1804
        %v1806 = vpop.f32.mrf.mxu0
        %v1807 = vadd.f32 %v1718, %v1806
        %1808 = vmatmul.bf16.gmra.mxu0 %v1542
        %v1809 = vpop.f32.mrf.mxu0
        %v1810 = vadd.f32 %v1721, %v1809
        %v1811 = vpop.f32.mrf.mxu0
        %v1812 = vadd.f32 %v1723, %v1811
        %1813 = vmatmul.bf16.gmra.mxu0 %v1544
        %v1814 = vpop.f32.mrf.mxu0
        %v1815 = vadd.f32 %v1726, %v1814
        %v1816 = vpop.f32.mrf.mxu0
        %v1817 = vadd.f32 %v1728, %v1816
        %1818 = vmatmul.bf16.gmra.mxu0 %v1546
        %v1819 = vpop.f32.mrf.mxu0
        %v1820 = vadd.f32 %v1731, %v1819
        %v1821 = vpop.f32.mrf.mxu0
        %v1822 = vadd.f32 %v1733, %v1821
        %1823 = vmatmul.bf16.gmra.mxu0 %v1548
        %v1824 = vpop.f32.mrf.mxu0
        %v1825 = vadd.f32 %v1736, %v1824
        %v1826 = vpop.f32.mrf.mxu0
        %v1827 = vadd.f32 %v1738, %v1826
        %1828 = vmatmul.bf16.gmra.mxu0 %v1550
        %v1829 = vpop.f32.mrf.mxu0
        %v1830 = vadd.f32 %v1741, %v1829
        %v1831 = vpop.f32.mrf.mxu0
        %v1832 = vadd.f32 %v1743, %v1831
        %1833 = vmatmul.bf16.gmra.mxu0 %v1552
        %v1834 = vpop.f32.mrf.mxu0
        %v1835 = vadd.f32 %v1746, %v1834
        %v1836 = vpop.f32.mrf.mxu0
        %v1837 = vadd.f32 %v1748, %v1836
        %1838 = vmatmul.bf16.gmra.mxu0 %v1554
        %v1839 = vpop.f32.mrf.mxu0
        %v1840 = vadd.f32 %v1751, %v1839
        %v1841 = vpop.f32.mrf.mxu0
        %v1842 = vadd.f32 %v1753, %v1841
        %1843 = vmatmul.bf16.gmra.mxu0 %v1556
        %v1844 = vpop.f32.mrf.mxu0
        %v1845 = vadd.f32 %v1756, %v1844
        %v1846 = vpop.f32.mrf.mxu0
        %v1847 = vadd.f32 %v1758, %v1846
        %1848 = vmatmul.bf16.gmra.mxu0 %v1558
        %v1849 = vpop.f32.mrf.mxu0
        %v1850 = vadd.f32 %v1761, %v1849
        %v1851 = vpop.f32.mrf.mxu0
        %v1852 = vadd.f32 %v1763, %v1851
        %1853 = vmatmul.bf16.gmra.mxu0 %v1560
        %v1854 = vpop.f32.mrf.mxu0
        %v1855 = vadd.f32 %v1766, %v1854
        %v1856 = vpop.f32.mrf.mxu0
        %v1857 = vadd.f32 %v1768, %v1856
        %1858 = vmatmul.bf16.gmra.mxu0 %v1562
        %v1859 = vpop.f32.mrf.mxu0
        %v1860 = vadd.f32 %v1771, %v1859
        %v1861 = vpop.f32.mrf.mxu0
        %v1862 = vadd.f32 %v1773, %v1861
        %1863 = vmatmul.bf16.gmra.mxu0 %v1564
        %v1864 = vpop.f32.mrf.mxu0
        %v1865 = vadd.f32 %v1776, %v1864
        %v1866 = vpop.f32.mrf.mxu0
        %v1867 = vadd.f32 %v1778, %v1866
        %1868 = vmatmul.bf16.gmra.mxu0 %v1566
        %v1869 = vpop.f32.mrf.mxu0
        %v1870 = vadd.f32 %v1781, %v1869
        %v1871 = vpop.f32.mrf.mxu0
        %v1872 = vadd.f32 %v1783, %v1871
        %1873 = vmatmul.bf16.gmra.mxu0 %v1568
        %v1874 = vpop.f32.mrf.mxu0
        %v1875 = vadd.f32 %v1786, %v1874
        %v1876 = vpop.f32.mrf.mxu0
        %v1877 = vadd.f32 %v1788, %v1876
        %1878 = vdwg.mxu0
        %1879 = vst [vmem:[%s284] sm:$0xff] %v1800
        %1880 = vst [vmem:[%s284 + $0x8] sm:$0xff] %v1802
        %1881 = vst [vmem:[%s284 + $0x10] sm:$0xff] %v1805
        %1882 = vst [vmem:[%s284 + $0x18] sm:$0xff] %v1807
        %1883 = vst [vmem:[%s284 + $0x20] sm:$0xff] %v1810
        %1884 = vst [vmem:[%s284 + $0x28] sm:$0xff] %v1812
        %1885 = vst [vmem:[%s284 + $0x30] sm:$0xff] %v1815
        %1886 = vst [vmem:[%s284 + $0x38] sm:$0xff] %v1817
        %1887 = vst [vmem:[%s284 + $0x40] sm:$0xff] %v1820
        %1888 = vst [vmem:[%s284 + $0x48] sm:$0xff] %v1822
        %1889 = vst [vmem:[%s284 + $0x50] sm:$0xff] %v1825
        %1890 = vst [vmem:[%s284 + $0x58] sm:$0xff] %v1827
        %1891 = vst [vmem:[%s284 + $0x60] sm:$0xff] %v1830
        %1892 = vst [vmem:[%s284 + $0x68] sm:$0xff] %v1832
        %1893 = vst [vmem:[%s284 + $0x70] sm:$0xff] %v1835
        %1894 = vst [vmem:[%s284 + $0x78] sm:$0xff] %v1837
        %1895 = vst [vmem:[%s284 + $0x80] sm:$0xff] %v1840
        %1896 = vst [vmem:[%s284 + $0x88] sm:$0xff] %v1842
        %1897 = vst [vmem:[%s284 + $0x90] sm:$0xff] %v1845
        %1898 = vst [vmem:[%s284 + $0x98] sm:$0xff] %v1847
        %1899 = vst [vmem:[%s284 + $0xa0] sm:$0xff] %v1850
        %1900 = vst [vmem:[%s284 + $0xa8] sm:$0xff] %v1852
        %1901 = vst [vmem:[%s284 + $0xb0] sm:$0xff] %v1855
        %1902 = vst [vmem:[%s284 + $0xb8] sm:$0xff] %v1857
        %1903 = vst [vmem:[%s284 + $0xc0] sm:$0xff] %v1860
        %1904 = vst [vmem:[%s284 + $0xc8] sm:$0xff] %v1862
        %1905 = vst [vmem:[%s284 + $0xd0] sm:$0xff] %v1865
        %1906 = vst [vmem:[%s284 + $0xd8] sm:$0xff] %v1867
        %1907 = vst [vmem:[%s284 + $0xe0] sm:$0xff] %v1870
        %1908 = vst [vmem:[%s284 + $0xe8] sm:$0xff] %v1872
        %1909 = vst [vmem:[%s284 + $0xf0] sm:$0xff] %v1875
        %1910 = vst [vmem:[%s284 + $0xf8] sm:$0xff] %v1877
        %s1911 = sand.u32 %s181, 1
        %s1912 = scalar_lea.sflag [#allocation3], %s1911
        %s1913 = sand.u32 %s181, 1
        %s1914 = smul.addr %s1913, 256
        %s1915 = scalar_lea.vmem [#allocation2], %s1914
        // Predicated region
        $region49: #{deep_kernel_forward.1} parent=47 // pred_check
          %p1916 = pneg %p191
        $region50: #{deep_kernel_forward.1} parent=47 // pred_check_branch
          %1918 = sbr.rel (%p1916) target = $region52
        $region51: #{deep_kernel_forward.1} parent=47 // pred_region
          %s1919 = smul.u32 32, %s21
          %s1920 = ssub.s32 38, %s1919
          %p1921 = scmp.lt.s32.totalorder %s1920, 32
          %s1922 = scalar_select %p1921, %s1920, 32
          %s1923 = smul.u32 8, %s1922
          %s1924 = ssub.s32 256, %s1923
          %s1925 = sshll.u32 %s1924, 4
          %1926 = vsyncadd %s1912, %s1925
          %p1927 = scmp.ne.s32.totalorder 0, %s1923
          %s1928 = smul.addr %s1919, 8
          %s1929 = scalar_lea.hbm %s7, %s1928
          %s1930 = smul.u32 8, %s1922
          %s1931 = sshll.u32 %s1915, 4
          %s1932 = int_to_ptr.vmem [resolvable:$true] %s1931
          %s1933 = sshll.u32 %s1929, 4
          %s1934 = int_to_ptr.hbm [resolvable:$true] %s1933
          %s1935 = sshll.u32 %s1930, 4
          %1939 = dma.vmem_to_hbm [thread:$0]  (%p1927), %s1932, %s1935, %s1934, %s1912, 128, 128, 8
        $region52: #{deep_kernel_forward.1} parent=47 // pred_fallthru
          _
      $region48: #{deep_kernel_forward.1} parent=5 // pred_fallthru
        _
      %p1940 = scmp.le.s32.totalorder 2, %s16
      // Predicated region
      $region53: #{deep_kernel_forward.1} parent=5 // pred_check
        %p1941 = pneg %p1940
      $region54: #{deep_kernel_forward.1} parent=5 // pred_check_branch
        %1943 = sbr.rel (%p1941) target = $region56
      $region55: #{deep_kernel_forward.1} parent=5 // pred_region
        %s1944 = ssub.s32 %s16, 2
        // Predicated region
        $region57: #{deep_kernel_forward.1} parent=55 // pred_check
          %p1945 = pneg %p197
        $region58: #{deep_kernel_forward.1} parent=55 // pred_check_branch
          %1947 = sbr.rel (%p1945) target = $region60
        $region59: #{deep_kernel_forward.1} parent=55 // pred_region
          %s1948 = sand.u32 %s182, 1
          %s1949 = scalar_lea.sflag [#allocation3], %s1948
          %s1950 = sand.u32 %s182, 1
          %s1951 = smul.addr %s1950, 256
          %s1952 = scalar_lea.vmem [#allocation2], %s1951
          %1954 = dma.done %s1949, 4096
        $region60: #{deep_kernel_forward.1} parent=55 // pred_fallthru
          _
      $region56: #{deep_kernel_forward.1} parent=5 // pred_fallthru
        _
    $region6: #{deep_kernel_forward.1} parent=1 // loop_footer
      %s20 = sadd.s32 1, %s16
    $region7: #{deep_kernel_forward.1} parent=1 // loop_footer_branch
      %15 = sbr.rel target = $region3
    $region8: #{deep_kernel_forward.1} parent=1 // loop_exit
      _
    %1955 = vsyncpa [#allocation3], 1
    %s1956 = scalar_lea.sflag [#allocation3], 1
    %1957 = vsyncpa %s1956, 1

</llo_original>
